<compile_context>
chip_gen: v5e
topology: v5e:2x2
jax: 0.10.0
libtpu: 0.0.40
codegen_flags: <defaults>
</compile_context>

<pallas_src>
import functools

import jax
import jax.numpy as jnp
from jax import lax
from jax.experimental import pallas as pl
from jax.experimental.pallas import tpu as pltpu


# ------------------------- parameter packing layout -------------------------
# params (SMEM, f32[40]):
#  0: cx0  1: cy0  2: f0  3: 1/f0  4: r1_0
#  5: cx1  6: cy1  7: f1  8: 1/f1  9: r1_1
# 10..18 : R2 (stereo rotation, row-major)
# 19..21 : T2 (stereo translation)
# 22..24 : c2 (camera-2 center in world = -R2^T T2)
# 25..27 : prism face normal (unit, world)
# 28..30 : prism center
# 31     : prism half thickness
# 32     : refractive index of glass
# 33     : 1 / refractive index of glass
# 34..39 : pad
N_PARAMS = 40

# merged output rows (19, n):
#  0..2  recon_3D (x, y, z)
#  3..4  recon_pixels_1            5..6  recon_pixels_2
#  7..8  recon_distorted_virtual_pixels_cam_0
#  9..10 recon_distorted_virtual_pixels_cam_1
# 11..12 recon_distorted_real_pixels_cam_0
# 13..14 recon_distorted_real_pixels_cam_1
# 15 cd_mean  16 cd_virtual  17 cd_real  18 cd_12 (== cd_21)


def _reproj_kernel(params_ref, nvalid_ref, pv_ref, pr_ref, out_ref, pen_ref,
                   *, cm):
    P = lambda i: params_ref[i]
    cx0, cy0, f0, inv_f0, r1_0 = P(0), P(1), P(2), P(3), P(4)
    cx1, cy1, f1, inv_f1, r1_1 = P(5), P(6), P(7), P(8), P(9)
    R2 = [[P(10 + 3 * i + j) for j in range(3)] for i in range(3)]
    T2 = [P(19), P(20), P(21)]
    c2 = [P(22), P(23), P(24)]
    pn = [P(25), P(26), P(27)]
    pc = [P(28), P(29), P(30)]
    half_t = P(31)
    ng = P(32)
    inv_ng = P(33)
    nvalid = nvalid_ref[0]
    eps = 1e-8

    tm = pv_ref.shape[1]                 # static block sublane extent
    n_chunks = tm // cm
    tile_base = pl.program_id(0) * (tm * 128)

    def dot3(a, b):
        return a[0] * b[0] + a[1] * b[1] + a[2] * b[2]

    def recip(x):
        # EUP approx reciprocal + one Newton step (~full f32 accuracy).
        r = pl.reciprocal(x, approx=True)
        return r * (2.0 - x * r)

    def undistort_norm(u, v, cx, cy, inv_f, r1):
        # undistorted *normalized* coords (shared with ray init) + penalty
        xn, yn = (u - cx) * inv_f, (v - cy) * inv_f
        q = r1 * (xn * xn + yn * yn)
        s = recip(1.0 + q)
        return xn * s, yn * s, q * q

    def ray_cam0(xn, yn):
        inv = lax.rsqrt(xn * xn + yn * yn + 1.0)
        return [0.0, 0.0, 0.0], [xn * inv, yn * inv, inv]

    def ray_cam1(xn, yn):
        inv = lax.rsqrt(xn * xn + yn * yn + 1.0)
        dc = [xn * inv, yn * inv, inv]
        d = [R2[0][i] * dc[0] + R2[1][i] * dc[1] + R2[2][i] * dc[2]
             for i in range(3)]           # world direction = R2^T @ d_cam
        return list(c2), d

    def closest_pt(o1, d1, o2, d2):
        # midpoint of the shortest segment between two unit-direction rays
        w = [o1[i] - o2[i] for i in range(3)]
        b = dot3(d1, d2)
        dd, e = dot3(d1, w), dot3(d2, w)
        den = 1.0 - b * b                 # >= 0 for unit directions
        den = jnp.where(den < 1e-9, 1e-9, den)
        inv_den = recip(den)
        t1 = (b * e - dd) * inv_den
        t2 = (e - b * dd) * inv_den
        p1 = [o1[i] + t1 * d1[i] for i in range(3)]
        p2 = [o2[i] + t2 * d2[i] for i in range(3)]
        mid = [(p1[i] + p2[i]) * 0.5 for i in range(3)]
        diff = [p1[i] - p2[i] for i in range(3)]
        dist = jnp.sqrt(dot3(diff, diff) + eps)
        return mid, dist

    def refract_unit(d, n_eff, eta):
        # n_eff already opposes the incident direction (ci >= 0).  The output
        # is exactly unit-length when k > 0, so no renormalization.
        # TODO(synk): under the TIR clamp (k -> 0) the direction is non-unit /
        # non-physical; original Prism handling unknown.
        ci = -dot3(n_eff, d)
        k = jnp.maximum(1.0 - eta * eta * (1.0 - ci * ci), 0.0)
        coef = eta * ci - jnp.sqrt(k)
        return [eta * d[i] + coef * n_eff[i] for i in range(3)]

    def plane_hit(o, d, p0, n):
        den = dot3(n, d)
        den = jnp.where(jnp.abs(den) < 1e-9,
                        jnp.where(den < 0.0, -1e-9, 1e-9), den)
        num = (n[0] * (p0[0] - o[0]) + n[1] * (p0[1] - o[1])
               + n[2] * (p0[2] - o[2]))
        t = num * recip(den)
        return [o[i] + t * d[i] for i in range(3)], t

    def prism(o, d):
        # TODO(synk): original Prism face geometry / intersection penalty not
        # available; modeled as a refracting slab normal to `pn`.
        sgn = jnp.where(dot3(pn, d) > 0.0, -1.0, 1.0)   # once per call
        n_eff = [pn[i] * sgn for i in range(3)]
        p_in = [pc[i] - half_t * pn[i] for i in range(3)]
        p_out = [pc[i] + half_t * pn[i] for i in range(3)]
        h1, t1 = plane_hit(o, d, p_in, pn)
        d1 = refract_unit(d, n_eff, inv_ng)
        h2, t2 = plane_hit(h1, d1, p_out, pn)
        d2 = refract_unit(d1, n_eff, ng)
        pen = jnp.maximum(-t1, 0.0) + jnp.maximum(-t2, 0.0)
        return h2, d2, pen

    def cam_xform(X, R, T):
        return [R[i][0] * X[0] + R[i][1] * X[1] + R[i][2] * X[2] + T[i]
                for i in range(3)]

    def project_norm(Xc):
        z = Xc[2]
        z = jnp.where(jnp.abs(z) < 1e-9,
                      jnp.where(z < 0.0, -1e-9, 1e-9), z)   # keep sign of z
        inv_z = recip(z)
        return Xc[0] * inv_z, Xc[1] * inv_z

    def norm_to_distorted(xn, yn, cx, cy, f, r1):
        s = 1.0 + r1 * (xn * xn + yn * yn)
        return cx + f * xn * s, cy + f * yn * s

    def distort_pixel(u, v, cx, cy, f, inv_f, r1):
        xn, yn = (u - cx) * inv_f, (v - cy) * inv_f
        return norm_to_distorted(xn, yn, cx, cy, f, r1)

    def chunk(c, carry):
        s_ip1, s_ip2, s_dp0, s_dp1 = carry
        off = pl.multiple_of(c * cm, cm)
        sl = pl.ds(off, cm)

        vu0 = pv_ref[0, sl, :]; vv0 = pv_ref[1, sl, :]
        vu1 = pv_ref[2, sl, :]; vv1 = pv_ref[3, sl, :]
        ru0 = pr_ref[0, sl, :]; rv0 = pr_ref[1, sl, :]
        ru1 = pr_ref[2, sl, :]; rv1 = pr_ref[3, sl, :]

        # ---- undistort (normalized coords shared with the penalty) ----
        vx0, vy0, pen_v0 = undistort_norm(vu0, vv0, cx0, cy0, inv_f0, r1_0)
        vx1, vy1, pen_v1 = undistort_norm(vu1, vv1, cx1, cy1, inv_f1, r1_1)
        rx0, ry0, pen_r0 = undistort_norm(ru0, rv0, cx0, cy0, inv_f0, r1_0)
        rx1, ry1, pen_r1 = undistort_norm(ru1, rv1, cx1, cy1, inv_f1, r1_1)
        dp0 = pen_v0 + pen_r0
        dp1 = pen_v1 + pen_r1

        # ---- real path (stored immediately to keep the live set small) ----
        o1r, d1r = ray_cam0(rx0, ry0)
        o2r, d2r = ray_cam1(rx1, ry1)
        X_real, cd_real = closest_pt(o1r, d1r, o2r, d2r)
        out_ref[17, sl, :] = cd_real
        rdr0 = norm_to_distorted(*project_norm(X_real), cx0, cy0, f0, r1_0)
        out_ref[11, sl, :] = rdr0[0]; out_ref[12, sl, :] = rdr0[1]
        rdr1 = norm_to_distorted(*project_norm(cam_xform(X_real, R2, T2)),
                                 cx1, cy1, f1, r1_1)
        out_ref[13, sl, :] = rdr1[0]; out_ref[14, sl, :] = rdr1[1]

        # ---- virtual path through the prism ----
        o1v, d1v = ray_cam0(vx0, vy0)
        o1vp, d1vp, ip1 = prism(o1v, d1v)
        o2v, d2v = ray_cam1(vx1, vy1)
        o2vp, d2vp, ip2 = prism(o2v, d2v)

        X_virt, cd_virt = closest_pt(o1vp, d1vp, o2vp, d2vp)
        out_ref[16, sl, :] = cd_virt
        # TODO(synk): distort_pixels_MLP is a learned MLP in the original;
        # the analytic radial model is used instead.
        rdv0 = norm_to_distorted(*project_norm(X_virt), cx0, cy0, f0, r1_0)
        out_ref[7, sl, :] = rdv0[0]; out_ref[8, sl, :] = rdv0[1]
        rdv1 = norm_to_distorted(*project_norm(cam_xform(X_virt, R2, T2)),
                                 cx1, cy1, f1, r1_1)
        out_ref[9, sl, :] = rdv1[0]; out_ref[10, sl, :] = rdv1[1]

        # Original calls closest_point(cam_1_ray_virtual, cam_2_ray_real)
        # twice with identical args — compute once (X_2 == X_1, cd_21 == cd_12).
        X_1, cd_12 = closest_pt(o1vp, d1vp, o2r, d2r)
        out_ref[18, sl, :] = cd_12
        out_ref[15, sl, :] = (2.0 * cd_12 + cd_real + cd_virt) * 0.25

        X = [(X_real[i] + 2.0 * X_1[i] + X_virt[i]) * 0.25 for i in range(3)]
        out_ref[0, sl, :] = X[0]
        out_ref[1, sl, :] = X[1]
        out_ref[2, sl, :] = X[2]

        rp1 = norm_to_distorted(*project_norm(X), cx0, cy0, f0, r1_0)
        out_ref[3, sl, :] = rp1[0]; out_ref[4, sl, :] = rp1[1]
        # recon_pixels_2: camera2.reproject then camera1.distort (as original)
        xn2, yn2 = project_norm(cam_xform(X, R2, T2))
        rp2 = distort_pixel(cx1 + f1 * xn2, cy1 + f1 * yn2,
                            cx0, cy0, f0, inv_f0, r1_0)
        out_ref[5, sl, :] = rp2[0]; out_ref[6, sl, :] = rp2[1]

        # ---- masked per-tile partial sums of the mean-only penalties ----
        sub = lax.broadcasted_iota(jnp.int32, (cm, 128), 0)
        lane = lax.broadcasted_iota(jnp.int32, (cm, 128), 1)
        gidx = tile_base + off * 128 + sub * 128 + lane
        valid = gidx < nvalid
        zero = jnp.zeros_like(dp0)
        s_ip1 = s_ip1 + jnp.sum(jnp.where(valid, ip1, zero),
                                axis=0, keepdims=True)
        s_ip2 = s_ip2 + jnp.sum(jnp.where(valid, ip2, zero),
                                axis=0, keepdims=True)
        s_dp0 = s_dp0 + jnp.sum(jnp.where(valid, dp0, zero),
                                axis=0, keepdims=True)
        s_dp1 = s_dp1 + jnp.sum(jnp.where(valid, dp1, zero),
                                axis=0, keepdims=True)
        return (s_ip1, s_ip2, s_dp0, s_dp1)

    zero_acc = jnp.zeros((1, 128), jnp.float32)
    s_ip1, s_ip2, s_dp0, s_dp1 = lax.fori_loop(
        0, n_chunks, chunk, (zero_acc, zero_acc, zero_acc, zero_acc))

    pen_ref[0, 0, :, :] = s_ip1
    pen_ref[0, 1, :, :] = s_ip2
    pen_ref[0, 2, :, :] = s_dp0
    pen_ref[0, 3, :, :] = s_dp1


# ------------------------------- JAX glue -----------------------------------
def _round_up(x, m):
    return -(-x // m) * m


def get_rot_mat(alpha, beta, gamma):
    ca, sa = jnp.cos(alpha), jnp.sin(alpha)
    cb, sb = jnp.cos(beta), jnp.sin(beta)
    cg, sg = jnp.cos(gamma), jnp.sin(gamma)
    Rx = jnp.array([[1, 0, 0], [0, ca, -sa], [0, sa, ca]], jnp.float32)
    Ry = jnp.array([[cb, 0, sb], [0, 1, 0], [-sb, 0, cb]], jnp.float32)
    Rz = jnp.array([[cg, -sg, 0], [sg, cg, 0], [0, 0, 1]], jnp.float32)
    return Rz @ Ry @ Rx


@functools.partial(jax.jit, static_argnames=("tile_m",))
def arena_reprojection_forward(params, pixels_virtual, pixels_real, tile_m=64):
    # tile_m: sublane extent of one point tile (points-per-step = tile_m*128).
    assert tile_m % 8 == 0
    n = pixels_virtual.shape[1]

    nb = -(-n // 128)                  # 128-lane blocks along the point axis
    if nb <= 8:
        tm = nb                        # single full-extent block
    elif nb <= tile_m:
        tm = _round_up(nb, 8)          # single block, 8-aligned for chunking
    else:
        tm = tile_m
    nb_pad = _round_up(nb, tm)
    n_pad = nb_pad * 128
    # block legality guard (8-divisible sublane extent OR full array extent)
    assert tm % 8 == 0 or tm == nb_pad

    pv = pixels_virtual.astype(jnp.float32)
    pr = pixels_real.astype(jnp.float32)
    if n_pad != n:
        # TODO(synk): only hit for unaligned N; align N upstream to avoid the copy.
        pv = jnp.pad(pv, ((0, 0), (0, n_pad - n)))
        pr = jnp.pad(pr, ((0, 0), (0, n_pad - n)))
    pv = pv.reshape(4, nb_pad, 128)
    pr = pr.reshape(4, nb_pad, 128)

    cm = min(8, tm)                    # inner chunk sublane extent
    assert tm % cm == 0
    num_tiles = nb_pad // tm
    nvalid = jnp.array([n], jnp.int32)

    out, pen = pl.pallas_call(
        functools.partial(_reproj_kernel, cm=cm),
        out_shape=(
            jax.ShapeDtypeStruct((19, nb_pad, 128), jnp.float32),
            jax.ShapeDtypeStruct((num_tiles, 4, 1, 128), jnp.float32),
        ),
        grid=(num_tiles,),
        in_specs=[
            pl.BlockSpec(memory_space=pltpu.MemorySpace.SMEM),   # params
            pl.BlockSpec(memory_space=pltpu.MemorySpace.SMEM),   # nvalid
            pl.BlockSpec((4, tm, 128), lambda i: (0, i, 0)),     # virtual px
            pl.BlockSpec((4, tm, 128), lambda i: (0, i, 0)),     # real px
        ],
        out_specs=(
            pl.BlockSpec((19, tm, 128), lambda i: (0, i, 0)),
            pl.BlockSpec((1, 4, 1, 128), lambda i: (i, 0, 0, 0)),
        ),
        compiler_params=pltpu.CompilerParams(
            dimension_semantics=("parallel",)),
    )(params, nvalid, pv, pr)

    out = out.reshape(19, n_pad)
    if n_pad != n:
        out = out[:, :n]
    pen_sums = pen.sum(axis=(0, 2, 3))
    inv_n = 1.0 / n

    return {
        "recon_3D": out[0:3],
        "recon_pixels_1": out[3:5],
        "recon_pixels_2": out[5:7],
        "recon_distorted_virtual_pixels_cam_0": out[7:9],
        "recon_distorted_virtual_pixels_cam_1": out[9:11],
        "recon_distorted_real_pixels_cam_0": out[11:13],
        "recon_distorted_real_pixels_cam_1": out[13:15],
        "closest_distance_mean": out[15],
        "closest_distance_virtual": out[16],
        "closest_distance_real": out[17],
        "closest_distance_12": out[18],
        "closest_distance_21": out[18],     # identical call in the original
        "intersection_penalty_1": pen_sums[0] * inv_n,
        "intersection_penalty_2": pen_sums[1] * inv_n,
        "distortion_penalty_cam_0": pen_sums[2] * inv_n,
        "distortion_penalty_cam_1": pen_sums[3] * inv_n,
    }


def build_params():
    # deterministic synthetic calibration (module __init__ equivalents)
    pp0 = jnp.array([320.0, 240.0], jnp.float32)
    pp1 = jnp.array([330.0, 250.0], jnp.float32)
    f0, f1 = 500.0, 510.0
    r1_0, r1_1 = 1e-6, 1e-6

    stereo_angles = jnp.array([0.10, -0.05, 0.02], jnp.float32)
    R2 = get_rot_mat(stereo_angles[0], stereo_angles[1], stereo_angles[2])
    T2 = jnp.array([-100.0, 5.0, 2.0], jnp.float32)
    c2 = -R2.T @ T2

    prism_angles = jnp.array([0.05, -0.03, 0.02], jnp.float32)
    Rp = get_rot_mat(prism_angles[0], prism_angles[1], prism_angles[2])
    prism_normal = Rp @ jnp.array([0.0, 0.0, 1.0], jnp.float32)
    prism_center = jnp.array([-5.0, 0.0, 100.0], jnp.float32)
    prism_size = jnp.array([20.0, 20.0, 20.0], jnp.float32)
    n_glass = 1.5

    params = jnp.concatenate([
        pp0, jnp.array([f0, 1.0 / f0, r1_0], jnp.float32),
        pp1, jnp.array([f1, 1.0 / f1, r1_1], jnp.float32),
        R2.reshape(-1), T2, c2,
        prism_normal, prism_center,
        jnp.array([float(prism_size[2]) * 0.5, n_glass, 1.0 / n_glass],
                  jnp.float32),
    ]).astype(jnp.float32)
    params = jnp.pad(params, (0, N_PARAMS - params.shape[0]))
    assert params.shape == (N_PARAMS,)
    return params


if __name__ == "__main__":
    key = jax.random.PRNGKey(0)
    k1, k2 = jax.random.split(key)
    N = 1024  # number of point correspondences (128-aligned -> no pad copies)

    centers = jnp.array([[320.0], [240.0], [330.0], [250.0]], jnp.float32)
    pixels_virtual = centers + 60.0 * jax.random.normal(k1, (4, N), jnp.float32)
    pixels_real = centers + 60.0 * jax.random.normal(k2, (4, N), jnp.float32)

    params = build_params()
    out = arena_reprojection_forward(params, pixels_virtual, pixels_real)
    jax.block_until_ready(out)
    print("KERNEL_OK")
</pallas_src>

<mosaic_0001>
module attributes {stable_mosaic.version = 11 : i64} {
  func.func @_reproj_kernel(%arg0: i32, %arg1: memref<40xf32, #tpu.memory_space<smem>>, %arg2: memref<1xi32, #tpu.memory_space<smem>>, %arg3: memref<4x8x128xf32, #tpu.memory_space<vmem>>, %arg4: memref<4x8x128xf32, #tpu.memory_space<vmem>>, %arg5: memref<19x8x128xf32, #tpu.memory_space<vmem>>, %arg6: memref<1x4x1x128xf32, #tpu.memory_space<vmem>>) attributes {dimension_semantics = [#tpu.dimension_semantics<parallel>], iteration_bounds = array<i64: 1>, scalar_prefetch = 0 : i64, scratch_operands = 0 : i64, tpu.core_type = #tpu.core_type<tc>, window_params = [{transform_indices = @transform_0, window_bounds = array<i64: 40>}, {transform_indices = @transform_1, window_bounds = array<i64: 1>}, {transform_indices = @transform_2, window_bounds = array<i64: 4, 8, 128>}, {transform_indices = @transform_3, window_bounds = array<i64: 4, 8, 128>}, {transform_indices = @transform_4, window_bounds = array<i64: 19, 8, 128>}, {transform_indices = @transform_5, window_bounds = array<i64: 1, 4, 1, 128>}]} {
    %c0 = arith.constant 0 : index
    %0 = memref.load %arg1[%c0] : memref<40xf32, #tpu.memory_space<smem>>
    %c1 = arith.constant 1 : index
    %1 = memref.load %arg1[%c1] : memref<40xf32, #tpu.memory_space<smem>>
    %c2 = arith.constant 2 : index
    %2 = memref.load %arg1[%c2] : memref<40xf32, #tpu.memory_space<smem>>
    %c3 = arith.constant 3 : index
    %3 = memref.load %arg1[%c3] : memref<40xf32, #tpu.memory_space<smem>>
    %c4 = arith.constant 4 : index
    %4 = memref.load %arg1[%c4] : memref<40xf32, #tpu.memory_space<smem>>
    %c5 = arith.constant 5 : index
    %5 = memref.load %arg1[%c5] : memref<40xf32, #tpu.memory_space<smem>>
    %c6 = arith.constant 6 : index
    %6 = memref.load %arg1[%c6] : memref<40xf32, #tpu.memory_space<smem>>
    %c7 = arith.constant 7 : index
    %7 = memref.load %arg1[%c7] : memref<40xf32, #tpu.memory_space<smem>>
    %c8 = arith.constant 8 : index
    %8 = memref.load %arg1[%c8] : memref<40xf32, #tpu.memory_space<smem>>
    %c9 = arith.constant 9 : index
    %9 = memref.load %arg1[%c9] : memref<40xf32, #tpu.memory_space<smem>>
    %c10 = arith.constant 10 : index
    %10 = memref.load %arg1[%c10] : memref<40xf32, #tpu.memory_space<smem>>
    %c11 = arith.constant 11 : index
    %11 = memref.load %arg1[%c11] : memref<40xf32, #tpu.memory_space<smem>>
    %c12 = arith.constant 12 : index
    %12 = memref.load %arg1[%c12] : memref<40xf32, #tpu.memory_space<smem>>
    %c13 = arith.constant 13 : index
    %13 = memref.load %arg1[%c13] : memref<40xf32, #tpu.memory_space<smem>>
    %c14 = arith.constant 14 : index
    %14 = memref.load %arg1[%c14] : memref<40xf32, #tpu.memory_space<smem>>
    %c15 = arith.constant 15 : index
    %15 = memref.load %arg1[%c15] : memref<40xf32, #tpu.memory_space<smem>>
    %c16 = arith.constant 16 : index
    %16 = memref.load %arg1[%c16] : memref<40xf32, #tpu.memory_space<smem>>
    %c17 = arith.constant 17 : index
    %17 = memref.load %arg1[%c17] : memref<40xf32, #tpu.memory_space<smem>>
    %c18 = arith.constant 18 : index
    %18 = memref.load %arg1[%c18] : memref<40xf32, #tpu.memory_space<smem>>
    %c19 = arith.constant 19 : index
    %19 = memref.load %arg1[%c19] : memref<40xf32, #tpu.memory_space<smem>>
    %c20 = arith.constant 20 : index
    %20 = memref.load %arg1[%c20] : memref<40xf32, #tpu.memory_space<smem>>
    %c21 = arith.constant 21 : index
    %21 = memref.load %arg1[%c21] : memref<40xf32, #tpu.memory_space<smem>>
    %c22 = arith.constant 22 : index
    %22 = memref.load %arg1[%c22] : memref<40xf32, #tpu.memory_space<smem>>
    %c23 = arith.constant 23 : index
    %23 = memref.load %arg1[%c23] : memref<40xf32, #tpu.memory_space<smem>>
    %c24 = arith.constant 24 : index
    %24 = memref.load %arg1[%c24] : memref<40xf32, #tpu.memory_space<smem>>
    %c25 = arith.constant 25 : index
    %25 = memref.load %arg1[%c25] : memref<40xf32, #tpu.memory_space<smem>>
    %c26 = arith.constant 26 : index
    %26 = memref.load %arg1[%c26] : memref<40xf32, #tpu.memory_space<smem>>
    %c27 = arith.constant 27 : index
    %27 = memref.load %arg1[%c27] : memref<40xf32, #tpu.memory_space<smem>>
    %c28 = arith.constant 28 : index
    %28 = memref.load %arg1[%c28] : memref<40xf32, #tpu.memory_space<smem>>
    %c29 = arith.constant 29 : index
    %29 = memref.load %arg1[%c29] : memref<40xf32, #tpu.memory_space<smem>>
    %c30 = arith.constant 30 : index
    %30 = memref.load %arg1[%c30] : memref<40xf32, #tpu.memory_space<smem>>
    %c31 = arith.constant 31 : index
    %31 = memref.load %arg1[%c31] : memref<40xf32, #tpu.memory_space<smem>>
    %c32 = arith.constant 32 : index
    %32 = memref.load %arg1[%c32] : memref<40xf32, #tpu.memory_space<smem>>
    %c33 = arith.constant 33 : index
    %33 = memref.load %arg1[%c33] : memref<40xf32, #tpu.memory_space<smem>>
    %c0_0 = arith.constant 0 : index
    %34 = memref.load %arg2[%c0_0] : memref<1xi32, #tpu.memory_space<smem>>
    %c1024_i32 = arith.constant 1024 : i32
    %35 = arith.muli %arg0, %c1024_i32 : i32
    %cst = arith.constant 0.000000e+00 : f32
    %36 = vector.broadcast %cst : f32 to vector<1x128xf32>
    %c0_i32 = arith.constant 0 : i32
    %c8_i32 = arith.constant 8 : i32
    %37 = arith.muli %c0_i32, %c8_i32 : i32
    %38 = tpu.assume_multiple %37, 8 : i32
    %c0_1 = arith.constant 0 : index
    %39 = arith.index_cast %38 : i32 to index
    %c0_2 = arith.constant 0 : index
    %40 = vector.load %arg3[%c0_1, %39, %c0_2] : memref<4x8x128xf32, #tpu.memory_space<vmem>>, vector<1x8x128xf32>
    %41 = vector.shape_cast %40 : vector<1x8x128xf32> to vector<8x128xf32>
    %c1_3 = arith.constant 1 : index
    %42 = arith.index_cast %38 : i32 to index
    %c0_4 = arith.constant 0 : index
    %43 = vector.load %arg3[%c1_3, %42, %c0_4] : memref<4x8x128xf32, #tpu.memory_space<vmem>>, vector<1x8x128xf32>
    %44 = vector.shape_cast %43 : vector<1x8x128xf32> to vector<8x128xf32>
    %c2_5 = arith.constant 2 : index
    %45 = arith.index_cast %38 : i32 to index
    %c0_6 = arith.constant 0 : index
    %46 = vector.load %arg3[%c2_5, %45, %c0_6] : memref<4x8x128xf32, #tpu.memory_space<vmem>>, vector<1x8x128xf32>
    %47 = vector.shape_cast %46 : vector<1x8x128xf32> to vector<8x128xf32>
    %c3_7 = arith.constant 3 : index
    %48 = arith.index_cast %38 : i32 to index
    %c0_8 = arith.constant 0 : index
    %49 = vector.load %arg3[%c3_7, %48, %c0_8] : memref<4x8x128xf32, #tpu.memory_space<vmem>>, vector<1x8x128xf32>
    %50 = vector.shape_cast %49 : vector<1x8x128xf32> to vector<8x128xf32>
    %c0_9 = arith.constant 0 : index
    %51 = arith.index_cast %38 : i32 to index
    %c0_10 = arith.constant 0 : index
    %52 = vector.load %arg4[%c0_9, %51, %c0_10] : memref<4x8x128xf32, #tpu.memory_space<vmem>>, vector<1x8x128xf32>
    %53 = vector.shape_cast %52 : vector<1x8x128xf32> to vector<8x128xf32>
    %c1_11 = arith.constant 1 : index
    %54 = arith.index_cast %38 : i32 to index
    %c0_12 = arith.constant 0 : index
    %55 = vector.load %arg4[%c1_11, %54, %c0_12] : memref<4x8x128xf32, #tpu.memory_space<vmem>>, vector<1x8x128xf32>
    %56 = vector.shape_cast %55 : vector<1x8x128xf32> to vector<8x128xf32>
    %c2_13 = arith.constant 2 : index
    %57 = arith.index_cast %38 : i32 to index
    %c0_14 = arith.constant 0 : index
    %58 = vector.load %arg4[%c2_13, %57, %c0_14] : memref<4x8x128xf32, #tpu.memory_space<vmem>>, vector<1x8x128xf32>
    %59 = vector.shape_cast %58 : vector<1x8x128xf32> to vector<8x128xf32>
    %c3_15 = arith.constant 3 : index
    %60 = arith.index_cast %38 : i32 to index
    %c0_16 = arith.constant 0 : index
    %61 = vector.load %arg4[%c3_15, %60, %c0_16] : memref<4x8x128xf32, #tpu.memory_space<vmem>>, vector<1x8x128xf32>
    %62 = vector.shape_cast %61 : vector<1x8x128xf32> to vector<8x128xf32>
    %63 = vector.broadcast %0 : f32 to vector<8x128xf32>
    %64 = arith.subf %41, %63 : vector<8x128xf32>
    %65 = vector.broadcast %3 : f32 to vector<8x128xf32>
    %66 = arith.mulf %64, %65 : vector<8x128xf32>
    %67 = vector.broadcast %1 : f32 to vector<8x128xf32>
    %68 = arith.subf %44, %67 : vector<8x128xf32>
    %69 = vector.broadcast %3 : f32 to vector<8x128xf32>
    %70 = arith.mulf %68, %69 : vector<8x128xf32>
    %71 = arith.mulf %66, %66 : vector<8x128xf32>
    %72 = arith.mulf %70, %70 : vector<8x128xf32>
    %73 = arith.addf %71, %72 : vector<8x128xf32>
    %74 = vector.broadcast %4 : f32 to vector<8x128xf32>
    %75 = arith.mulf %74, %73 : vector<8x128xf32>
    %cst_17 = arith.constant 1.000000e+00 : f32
    %76 = vector.broadcast %cst_17 : f32 to vector<8x128xf32>
    %77 = arith.addf %76, %75 : vector<8x128xf32>
    %78 = tpu.reciprocal %77 {approx = true} : vector<8x128xf32> -> vector<8x128xf32>
    %79 = arith.mulf %77, %78 : vector<8x128xf32>
    %cst_18 = arith.constant 2.000000e+00 : f32
    %80 = vector.broadcast %cst_18 : f32 to vector<8x128xf32>
    %81 = arith.subf %80, %79 : vector<8x128xf32>
    %82 = arith.mulf %78, %81 : vector<8x128xf32>
    %83 = arith.mulf %66, %82 : vector<8x128xf32>
    %84 = arith.mulf %70, %82 : vector<8x128xf32>
    %85 = arith.mulf %75, %75 : vector<8x128xf32>
    %86 = vector.broadcast %5 : f32 to vector<8x128xf32>
    %87 = arith.subf %47, %86 : vector<8x128xf32>
    %88 = vector.broadcast %8 : f32 to vector<8x128xf32>
    %89 = arith.mulf %87, %88 : vector<8x128xf32>
    %90 = vector.broadcast %6 : f32 to vector<8x128xf32>
    %91 = arith.subf %50, %90 : vector<8x128xf32>
    %92 = vector.broadcast %8 : f32 to vector<8x128xf32>
    %93 = arith.mulf %91, %92 : vector<8x128xf32>
    %94 = arith.mulf %89, %89 : vector<8x128xf32>
    %95 = arith.mulf %93, %93 : vector<8x128xf32>
    %96 = arith.addf %94, %95 : vector<8x128xf32>
    %97 = vector.broadcast %9 : f32 to vector<8x128xf32>
    %98 = arith.mulf %97, %96 : vector<8x128xf32>
    %cst_19 = arith.constant 1.000000e+00 : f32
    %99 = vector.broadcast %cst_19 : f32 to vector<8x128xf32>
    %100 = arith.addf %99, %98 : vector<8x128xf32>
    %101 = tpu.reciprocal %100 {approx = true} : vector<8x128xf32> -> vector<8x128xf32>
    %102 = arith.mulf %100, %101 : vector<8x128xf32>
    %cst_20 = arith.constant 2.000000e+00 : f32
    %103 = vector.broadcast %cst_20 : f32 to vector<8x128xf32>
    %104 = arith.subf %103, %102 : vector<8x128xf32>
    %105 = arith.mulf %101, %104 : vector<8x128xf32>
    %106 = arith.mulf %89, %105 : vector<8x128xf32>
    %107 = arith.mulf %93, %105 : vector<8x128xf32>
    %108 = arith.mulf %98, %98 : vector<8x128xf32>
    %109 = vector.broadcast %0 : f32 to vector<8x128xf32>
    %110 = arith.subf %53, %109 : vector<8x128xf32>
    %111 = vector.broadcast %3 : f32 to vector<8x128xf32>
    %112 = arith.mulf %110, %111 : vector<8x128xf32>
    %113 = vector.broadcast %1 : f32 to vector<8x128xf32>
    %114 = arith.subf %56, %113 : vector<8x128xf32>
    %115 = vector.broadcast %3 : f32 to vector<8x128xf32>
    %116 = arith.mulf %114, %115 : vector<8x128xf32>
    %117 = arith.mulf %112, %112 : vector<8x128xf32>
    %118 = arith.mulf %116, %116 : vector<8x128xf32>
    %119 = arith.addf %117, %118 : vector<8x128xf32>
    %120 = vector.broadcast %4 : f32 to vector<8x128xf32>
    %121 = arith.mulf %120, %119 : vector<8x128xf32>
    %cst_21 = arith.constant 1.000000e+00 : f32
    %122 = vector.broadcast %cst_21 : f32 to vector<8x128xf32>
    %123 = arith.addf %122, %121 : vector<8x128xf32>
    %124 = tpu.reciprocal %123 {approx = true} : vector<8x128xf32> -> vector<8x128xf32>
    %125 = arith.mulf %123, %124 : vector<8x128xf32>
    %cst_22 = arith.constant 2.000000e+00 : f32
    %126 = vector.broadcast %cst_22 : f32 to vector<8x128xf32>
    %127 = arith.subf %126, %125 : vector<8x128xf32>
    %128 = arith.mulf %124, %127 : vector<8x128xf32>
    %129 = arith.mulf %112, %128 : vector<8x128xf32>
    %130 = arith.mulf %116, %128 : vector<8x128xf32>
    %131 = arith.mulf %121, %121 : vector<8x128xf32>
    %132 = vector.broadcast %5 : f32 to vector<8x128xf32>
    %133 = arith.subf %59, %132 : vector<8x128xf32>
    %134 = vector.broadcast %8 : f32 to vector<8x128xf32>
    %135 = arith.mulf %133, %134 : vector<8x128xf32>
    %136 = vector.broadcast %6 : f32 to vector<8x128xf32>
    %137 = arith.subf %62, %136 : vector<8x128xf32>
    %138 = vector.broadcast %8 : f32 to vector<8x128xf32>
    %139 = arith.mulf %137, %138 : vector<8x128xf32>
    %140 = arith.mulf %135, %135 : vector<8x128xf32>
    %141 = arith.mulf %139, %139 : vector<8x128xf32>
    %142 = arith.addf %140, %141 : vector<8x128xf32>
    %143 = vector.broadcast %9 : f32 to vector<8x128xf32>
    %144 = arith.mulf %143, %142 : vector<8x128xf32>
    %cst_23 = arith.constant 1.000000e+00 : f32
    %145 = vector.broadcast %cst_23 : f32 to vector<8x128xf32>
    %146 = arith.addf %145, %144 : vector<8x128xf32>
    %147 = tpu.reciprocal %146 {approx = true} : vector<8x128xf32> -> vector<8x128xf32>
    %148 = arith.mulf %146, %147 : vector<8x128xf32>
    %cst_24 = arith.constant 2.000000e+00 : f32
    %149 = vector.broadcast %cst_24 : f32 to vector<8x128xf32>
    %150 = arith.subf %149, %148 : vector<8x128xf32>
    %151 = arith.mulf %147, %150 : vector<8x128xf32>
    %152 = arith.mulf %135, %151 : vector<8x128xf32>
    %153 = arith.mulf %139, %151 : vector<8x128xf32>
    %154 = arith.mulf %144, %144 : vector<8x128xf32>
    %155 = arith.addf %85, %131 : vector<8x128xf32>
    %156 = arith.addf %108, %154 : vector<8x128xf32>
    %157 = arith.mulf %129, %129 : vector<8x128xf32>
    %158 = arith.mulf %130, %130 : vector<8x128xf32>
    %159 = arith.addf %157, %158 : vector<8x128xf32>
    %cst_25 = arith.constant 1.000000e+00 : f32
    %160 = vector.broadcast %cst_25 : f32 to vector<8x128xf32>
    %161 = arith.addf %159, %160 : vector<8x128xf32>
    %162 = math.rsqrt %161 : vector<8x128xf32>
    %163 = arith.mulf %129, %162 : vector<8x128xf32>
    %164 = arith.mulf %130, %162 : vector<8x128xf32>
    %165 = arith.mulf %152, %152 : vector<8x128xf32>
    %166 = arith.mulf %153, %153 : vector<8x128xf32>
    %167 = arith.addf %165, %166 : vector<8x128xf32>
    %cst_26 = arith.constant 1.000000e+00 : f32
    %168 = vector.broadcast %cst_26 : f32 to vector<8x128xf32>
    %169 = arith.addf %167, %168 : vector<8x128xf32>
    %170 = math.rsqrt %169 : vector<8x128xf32>
    %171 = arith.mulf %152, %170 : vector<8x128xf32>
    %172 = arith.mulf %153, %170 : vector<8x128xf32>
    %173 = vector.broadcast %10 : f32 to vector<8x128xf32>
    %174 = arith.mulf %173, %171 : vector<8x128xf32>
    %175 = vector.broadcast %13 : f32 to vector<8x128xf32>
    %176 = arith.mulf %175, %172 : vector<8x128xf32>
    %177 = arith.addf %174, %176 : vector<8x128xf32>
    %178 = vector.broadcast %16 : f32 to vector<8x128xf32>
    %179 = arith.mulf %178, %170 : vector<8x128xf32>
    %180 = arith.addf %177, %179 : vector<8x128xf32>
    %181 = vector.broadcast %11 : f32 to vector<8x128xf32>
    %182 = arith.mulf %181, %171 : vector<8x128xf32>
    %183 = vector.broadcast %14 : f32 to vector<8x128xf32>
    %184 = arith.mulf %183, %172 : vector<8x128xf32>
    %185 = arith.addf %182, %184 : vector<8x128xf32>
    %186 = vector.broadcast %17 : f32 to vector<8x128xf32>
    %187 = arith.mulf %186, %170 : vector<8x128xf32>
    %188 = arith.addf %185, %187 : vector<8x128xf32>
    %189 = vector.broadcast %12 : f32 to vector<8x128xf32>
    %190 = arith.mulf %189, %171 : vector<8x128xf32>
    %191 = vector.broadcast %15 : f32 to vector<8x128xf32>
    %192 = arith.mulf %191, %172 : vector<8x128xf32>
    %193 = arith.addf %190, %192 : vector<8x128xf32>
    %194 = vector.broadcast %18 : f32 to vector<8x128xf32>
    %195 = arith.mulf %194, %170 : vector<8x128xf32>
    %196 = arith.addf %193, %195 : vector<8x128xf32>
    %cst_27 = arith.constant 0.000000e+00 : f32
    %197 = arith.subf %cst_27, %22 : f32
    %cst_28 = arith.constant 0.000000e+00 : f32
    %198 = arith.subf %cst_28, %23 : f32
    %cst_29 = arith.constant 0.000000e+00 : f32
    %199 = arith.subf %cst_29, %24 : f32
    %200 = arith.mulf %163, %180 : vector<8x128xf32>
    %201 = arith.mulf %164, %188 : vector<8x128xf32>
    %202 = arith.addf %200, %201 : vector<8x128xf32>
    %203 = arith.mulf %162, %196 : vector<8x128xf32>
    %204 = arith.addf %202, %203 : vector<8x128xf32>
    %205 = vector.broadcast %197 : f32 to vector<8x128xf32>
    %206 = arith.mulf %163, %205 : vector<8x128xf32>
    %207 = vector.broadcast %198 : f32 to vector<8x128xf32>
    %208 = arith.mulf %164, %207 : vector<8x128xf32>
    %209 = arith.addf %206, %208 : vector<8x128xf32>
    %210 = vector.broadcast %199 : f32 to vector<8x128xf32>
    %211 = arith.mulf %162, %210 : vector<8x128xf32>
    %212 = arith.addf %209, %211 : vector<8x128xf32>
    %213 = vector.broadcast %197 : f32 to vector<8x128xf32>
    %214 = arith.mulf %180, %213 : vector<8x128xf32>
    %215 = vector.broadcast %198 : f32 to vector<8x128xf32>
    %216 = arith.mulf %188, %215 : vector<8x128xf32>
    %217 = arith.addf %214, %216 : vector<8x128xf32>
    %218 = vector.broadcast %199 : f32 to vector<8x128xf32>
    %219 = arith.mulf %196, %218 : vector<8x128xf32>
    %220 = arith.addf %217, %219 : vector<8x128xf32>
    %221 = arith.mulf %204, %204 : vector<8x128xf32>
    %cst_30 = arith.constant 1.000000e+00 : f32
    %222 = vector.broadcast %cst_30 : f32 to vector<8x128xf32>
    %223 = arith.subf %222, %221 : vector<8x128xf32>
    %cst_31 = arith.constant 9.99999971E-10 : f32
    %224 = vector.broadcast %cst_31 : f32 to vector<8x128xf32>
    %225 = arith.cmpf olt, %223, %224 : vector<8x128xf32>
    %cst_32 = arith.constant 9.99999971E-10 : f32
    %226 = vector.broadcast %cst_32 : f32 to vector<8x128xf32>
    %227 = arith.select %225, %226, %223 : vector<8x128xi1>, vector<8x128xf32>
    %228 = tpu.reciprocal %227 {approx = true} : vector<8x128xf32> -> vector<8x128xf32>
    %229 = arith.mulf %227, %228 : vector<8x128xf32>
    %cst_33 = arith.constant 2.000000e+00 : f32
    %230 = vector.broadcast %cst_33 : f32 to vector<8x128xf32>
    %231 = arith.subf %230, %229 : vector<8x128xf32>
    %232 = arith.mulf %228, %231 : vector<8x128xf32>
    %233 = arith.mulf %204, %220 : vector<8x128xf32>
    %234 = arith.subf %233, %212 : vector<8x128xf32>
    %235 = arith.mulf %234, %232 : vector<8x128xf32>
    %236 = arith.mulf %204, %212 : vector<8x128xf32>
    %237 = arith.subf %220, %236 : vector<8x128xf32>
    %238 = arith.mulf %237, %232 : vector<8x128xf32>
    %239 = arith.mulf %235, %163 : vector<8x128xf32>
    %cst_34 = arith.constant 0.000000e+00 : f32
    %240 = vector.broadcast %cst_34 : f32 to vector<8x128xf32>
    %241 = arith.addf %240, %239 : vector<8x128xf32>
    %242 = arith.mulf %235, %164 : vector<8x128xf32>
    %cst_35 = arith.constant 0.000000e+00 : f32
    %243 = vector.broadcast %cst_35 : f32 to vector<8x128xf32>
    %244 = arith.addf %243, %242 : vector<8x128xf32>
    %245 = arith.mulf %235, %162 : vector<8x128xf32>
    %cst_36 = arith.constant 0.000000e+00 : f32
    %246 = vector.broadcast %cst_36 : f32 to vector<8x128xf32>
    %247 = arith.addf %246, %245 : vector<8x128xf32>
    %248 = arith.mulf %238, %180 : vector<8x128xf32>
    %249 = vector.broadcast %22 : f32 to vector<8x128xf32>
    %250 = arith.addf %249, %248 : vector<8x128xf32>
    %251 = arith.mulf %238, %188 : vector<8x128xf32>
    %252 = vector.broadcast %23 : f32 to vector<8x128xf32>
    %253 = arith.addf %252, %251 : vector<8x128xf32>
    %254 = arith.mulf %238, %196 : vector<8x128xf32>
    %255 = vector.broadcast %24 : f32 to vector<8x128xf32>
    %256 = arith.addf %255, %254 : vector<8x128xf32>
    %257 = arith.addf %241, %250 : vector<8x128xf32>
    %cst_37 = arith.constant 5.000000e-01 : f32
    %258 = vector.broadcast %cst_37 : f32 to vector<8x128xf32>
    %259 = arith.mulf %257, %258 : vector<8x128xf32>
    %260 = arith.addf %244, %253 : vector<8x128xf32>
    %cst_38 = arith.constant 5.000000e-01 : f32
    %261 = vector.broadcast %cst_38 : f32 to vector<8x128xf32>
    %262 = arith.mulf %260, %261 : vector<8x128xf32>
    %263 = arith.addf %247, %256 : vector<8x128xf32>
    %cst_39 = arith.constant 5.000000e-01 : f32
    %264 = vector.broadcast %cst_39 : f32 to vector<8x128xf32>
    %265 = arith.mulf %263, %264 : vector<8x128xf32>
    %266 = arith.subf %241, %250 : vector<8x128xf32>
    %267 = arith.subf %244, %253 : vector<8x128xf32>
    %268 = arith.subf %247, %256 : vector<8x128xf32>
    %269 = arith.mulf %266, %266 : vector<8x128xf32>
    %270 = arith.mulf %267, %267 : vector<8x128xf32>
    %271 = arith.addf %269, %270 : vector<8x128xf32>
    %272 = arith.mulf %268, %268 : vector<8x128xf32>
    %273 = arith.addf %271, %272 : vector<8x128xf32>
    %cst_40 = arith.constant 9.99999993E-9 : f32
    %274 = vector.broadcast %cst_40 : f32 to vector<8x128xf32>
    %275 = arith.addf %273, %274 : vector<8x128xf32>
    %276 = math.sqrt %275 : vector<8x128xf32>
    %c17_41 = arith.constant 17 : index
    %277 = arith.index_cast %38 : i32 to index
    %c0_42 = arith.constant 0 : index
    %278 = vector.load %arg5[%c17_41, %277, %c0_42] : memref<19x8x128xf32, #tpu.memory_space<vmem>>, vector<1x8x128xf32>
    %279 = vector.shape_cast %278 : vector<1x8x128xf32> to vector<8x128xf32>
    %280 = vector.shape_cast %276 : vector<8x128xf32> to vector<1x8x128xf32>
    tpu.vector_store %arg5[%c17_41, %277, %c0_42], %280 {strides = array<i32>} : memref<19x8x128xf32, #tpu.memory_space<vmem>>, vector<1x8x128xf32>,
    %281 = math.absf %265 : vector<8x128xf32>
    %cst_43 = arith.constant 9.99999971E-10 : f32
    %282 = vector.broadcast %cst_43 : f32 to vector<8x128xf32>
    %283 = arith.cmpf olt, %281, %282 : vector<8x128xf32>
    %cst_44 = arith.constant 0.000000e+00 : f32
    %284 = vector.broadcast %cst_44 : f32 to vector<8x128xf32>
    %285 = arith.cmpf olt, %265, %284 : vector<8x128xf32>
    %cst_45 = arith.constant -9.99999971E-10 : f32
    %cst_46 = arith.constant 9.99999971E-10 : f32
    %286 = vector.broadcast %cst_45 : f32 to vector<8x128xf32>
    %287 = vector.broadcast %cst_46 : f32 to vector<8x128xf32>
    %288 = arith.select %285, %286, %287 : vector<8x128xi1>, vector<8x128xf32>
    %289 = arith.select %283, %288, %265 : vector<8x128xi1>, vector<8x128xf32>
    %290 = tpu.reciprocal %289 {approx = true} : vector<8x128xf32> -> vector<8x128xf32>
    %291 = arith.mulf %289, %290 : vector<8x128xf32>
    %cst_47 = arith.constant 2.000000e+00 : f32
    %292 = vector.broadcast %cst_47 : f32 to vector<8x128xf32>
    %293 = arith.subf %292, %291 : vector<8x128xf32>
    %294 = arith.mulf %290, %293 : vector<8x128xf32>
    %295 = arith.mulf %259, %294 : vector<8x128xf32>
    %296 = arith.mulf %262, %294 : vector<8x128xf32>
    %297 = arith.mulf %295, %295 : vector<8x128xf32>
    %298 = arith.mulf %296, %296 : vector<8x128xf32>
    %299 = arith.addf %297, %298 : vector<8x128xf32>
    %300 = vector.broadcast %4 : f32 to vector<8x128xf32>
    %301 = arith.mulf %300, %299 : vector<8x128xf32>
    %cst_48 = arith.constant 1.000000e+00 : f32
    %302 = vector.broadcast %cst_48 : f32 to vector<8x128xf32>
    %303 = arith.addf %302, %301 : vector<8x128xf32>
    %304 = vector.broadcast %2 : f32 to vector<8x128xf32>
    %305 = arith.mulf %304, %295 : vector<8x128xf32>
    %306 = arith.mulf %305, %303 : vector<8x128xf32>
    %307 = vector.broadcast %0 : f32 to vector<8x128xf32>
    %308 = arith.addf %307, %306 : vector<8x128xf32>
    %309 = vector.broadcast %2 : f32 to vector<8x128xf32>
    %310 = arith.mulf %309, %296 : vector<8x128xf32>
    %311 = arith.mulf %310, %303 : vector<8x128xf32>
    %312 = vector.broadcast %1 : f32 to vector<8x128xf32>
    %313 = arith.addf %312, %311 : vector<8x128xf32>
    %c11_49 = arith.constant 11 : index
    %314 = arith.index_cast %38 : i32 to index
    %c0_50 = arith.constant 0 : index
    %315 = vector.load %arg5[%c11_49, %314, %c0_50] : memref<19x8x128xf32, #tpu.memory_space<vmem>>, vector<1x8x128xf32>
    %316 = vector.shape_cast %315 : vector<1x8x128xf32> to vector<8x128xf32>
    %317 = vector.shape_cast %308 : vector<8x128xf32> to vector<1x8x128xf32>
    tpu.vector_store %arg5[%c11_49, %314, %c0_50], %317 {strides = array<i32>} : memref<19x8x128xf32, #tpu.memory_space<vmem>>, vector<1x8x128xf32>,
    %c12_51 = arith.constant 12 : index
    %318 = arith.index_cast %38 : i32 to index
    %c0_52 = arith.constant 0 : index
    %319 = vector.load %arg5[%c12_51, %318, %c0_52] : memref<19x8x128xf32, #tpu.memory_space<vmem>>, vector<1x8x128xf32>
    %320 = vector.shape_cast %319 : vector<1x8x128xf32> to vector<8x128xf32>
    %321 = vector.shape_cast %313 : vector<8x128xf32> to vector<1x8x128xf32>
    tpu.vector_store %arg5[%c12_51, %318, %c0_52], %321 {strides = array<i32>} : memref<19x8x128xf32, #tpu.memory_space<vmem>>, vector<1x8x128xf32>,
    %322 = vector.broadcast %10 : f32 to vector<8x128xf32>
    %323 = arith.mulf %322, %259 : vector<8x128xf32>
    %324 = vector.broadcast %11 : f32 to vector<8x128xf32>
    %325 = arith.mulf %324, %262 : vector<8x128xf32>
    %326 = arith.addf %323, %325 : vector<8x128xf32>
    %327 = vector.broadcast %12 : f32 to vector<8x128xf32>
    %328 = arith.mulf %327, %265 : vector<8x128xf32>
    %329 = arith.addf %326, %328 : vector<8x128xf32>
    %330 = vector.broadcast %19 : f32 to vector<8x128xf32>
    %331 = arith.addf %329, %330 : vector<8x128xf32>
    %332 = vector.broadcast %13 : f32 to vector<8x128xf32>
    %333 = arith.mulf %332, %259 : vector<8x128xf32>
    %334 = vector.broadcast %14 : f32 to vector<8x128xf32>
    %335 = arith.mulf %334, %262 : vector<8x128xf32>
    %336 = arith.addf %333, %335 : vector<8x128xf32>
    %337 = vector.broadcast %15 : f32 to vector<8x128xf32>
    %338 = arith.mulf %337, %265 : vector<8x128xf32>
    %339 = arith.addf %336, %338 : vector<8x128xf32>
    %340 = vector.broadcast %20 : f32 to vector<8x128xf32>
    %341 = arith.addf %339, %340 : vector<8x128xf32>
    %342 = vector.broadcast %16 : f32 to vector<8x128xf32>
    %343 = arith.mulf %342, %259 : vector<8x128xf32>
    %344 = vector.broadcast %17 : f32 to vector<8x128xf32>
    %345 = arith.mulf %344, %262 : vector<8x128xf32>
    %346 = arith.addf %343, %345 : vector<8x128xf32>
    %347 = vector.broadcast %18 : f32 to vector<8x128xf32>
    %348 = arith.mulf %347, %265 : vector<8x128xf32>
    %349 = arith.addf %346, %348 : vector<8x128xf32>
    %350 = vector.broadcast %21 : f32 to vector<8x128xf32>
    %351 = arith.addf %349, %350 : vector<8x128xf32>
    %352 = math.absf %351 : vector<8x128xf32>
    %cst_53 = arith.constant 9.99999971E-10 : f32
    %353 = vector.broadcast %cst_53 : f32 to vector<8x128xf32>
    %354 = arith.cmpf olt, %352, %353 : vector<8x128xf32>
    %cst_54 = arith.constant 0.000000e+00 : f32
    %355 = vector.broadcast %cst_54 : f32 to vector<8x128xf32>
    %356 = arith.cmpf olt, %351, %355 : vector<8x128xf32>
    %cst_55 = arith.constant -9.99999971E-10 : f32
    %cst_56 = arith.constant 9.99999971E-10 : f32
    %357 = vector.broadcast %cst_55 : f32 to vector<8x128xf32>
    %358 = vector.broadcast %cst_56 : f32 to vector<8x128xf32>
    %359 = arith.select %356, %357, %358 : vector<8x128xi1>, vector<8x128xf32>
    %360 = arith.select %354, %359, %351 : vector<8x128xi1>, vector<8x128xf32>
    %361 = tpu.reciprocal %360 {approx = true} : vector<8x128xf32> -> vector<8x128xf32>
    %362 = arith.mulf %360, %361 : vector<8x128xf32>
    %cst_57 = arith.constant 2.000000e+00 : f32
    %363 = vector.broadcast %cst_57 : f32 to vector<8x128xf32>
    %364 = arith.subf %363, %362 : vector<8x128xf32>
    %365 = arith.mulf %361, %364 : vector<8x128xf32>
    %366 = arith.mulf %331, %365 : vector<8x128xf32>
    %367 = arith.mulf %341, %365 : vector<8x128xf32>
    %368 = arith.mulf %366, %366 : vector<8x128xf32>
    %369 = arith.mulf %367, %367 : vector<8x128xf32>
    %370 = arith.addf %368, %369 : vector<8x128xf32>
    %371 = vector.broadcast %9 : f32 to vector<8x128xf32>
    %372 = arith.mulf %371, %370 : vector<8x128xf32>
    %cst_58 = arith.constant 1.000000e+00 : f32
    %373 = vector.broadcast %cst_58 : f32 to vector<8x128xf32>
    %374 = arith.addf %373, %372 : vector<8x128xf32>
    %375 = vector.broadcast %7 : f32 to vector<8x128xf32>
    %376 = arith.mulf %375, %366 : vector<8x128xf32>
    %377 = arith.mulf %376, %374 : vector<8x128xf32>
    %378 = vector.broadcast %5 : f32 to vector<8x128xf32>
    %379 = arith.addf %378, %377 : vector<8x128xf32>
    %380 = vector.broadcast %7 : f32 to vector<8x128xf32>
    %381 = arith.mulf %380, %367 : vector<8x128xf32>
    %382 = arith.mulf %381, %374 : vector<8x128xf32>
    %383 = vector.broadcast %6 : f32 to vector<8x128xf32>
    %384 = arith.addf %383, %382 : vector<8x128xf32>
    %c13_59 = arith.constant 13 : index
    %385 = arith.index_cast %38 : i32 to index
    %c0_60 = arith.constant 0 : index
    %386 = vector.load %arg5[%c13_59, %385, %c0_60] : memref<19x8x128xf32, #tpu.memory_space<vmem>>, vector<1x8x128xf32>
    %387 = vector.shape_cast %386 : vector<1x8x128xf32> to vector<8x128xf32>
    %388 = vector.shape_cast %379 : vector<8x128xf32> to vector<1x8x128xf32>
    tpu.vector_store %arg5[%c13_59, %385, %c0_60], %388 {strides = array<i32>} : memref<19x8x128xf32, #tpu.memory_space<vmem>>, vector<1x8x128xf32>,
    %c14_61 = arith.constant 14 : index
    %389 = arith.index_cast %38 : i32 to index
    %c0_62 = arith.constant 0 : index
    %390 = vector.load %arg5[%c14_61, %389, %c0_62] : memref<19x8x128xf32, #tpu.memory_space<vmem>>, vector<1x8x128xf32>
    %391 = vector.shape_cast %390 : vector<1x8x128xf32> to vector<8x128xf32>
    %392 = vector.shape_cast %384 : vector<8x128xf32> to vector<1x8x128xf32>
    tpu.vector_store %arg5[%c14_61, %389, %c0_62], %392 {strides = array<i32>} : memref<19x8x128xf32, #tpu.memory_space<vmem>>, vector<1x8x128xf32>,
    %393 = arith.mulf %83, %83 : vector<8x128xf32>
    %394 = arith.mulf %84, %84 : vector<8x128xf32>
    %395 = arith.addf %393, %394 : vector<8x128xf32>
    %cst_63 = arith.constant 1.000000e+00 : f32
    %396 = vector.broadcast %cst_63 : f32 to vector<8x128xf32>
    %397 = arith.addf %395, %396 : vector<8x128xf32>
    %398 = math.rsqrt %397 : vector<8x128xf32>
    %399 = arith.mulf %83, %398 : vector<8x128xf32>
    %400 = arith.mulf %84, %398 : vector<8x128xf32>
    %401 = vector.broadcast %25 : f32 to vector<8x128xf32>
    %402 = arith.mulf %401, %399 : vector<8x128xf32>
    %403 = vector.broadcast %26 : f32 to vector<8x128xf32>
    %404 = arith.mulf %403, %400 : vector<8x128xf32>
    %405 = arith.addf %402, %404 : vector<8x128xf32>
    %406 = vector.broadcast %27 : f32 to vector<8x128xf32>
    %407 = arith.mulf %406, %398 : vector<8x128xf32>
    %408 = arith.addf %405, %407 : vector<8x128xf32>
    %cst_64 = arith.constant 0.000000e+00 : f32
    %409 = vector.broadcast %cst_64 : f32 to vector<8x128xf32>
    %410 = arith.cmpf ogt, %408, %409 : vector<8x128xf32>
    %cst_65 = arith.constant -1.000000e+00 : f32
    %cst_66 = arith.constant 1.000000e+00 : f32
    %411 = vector.broadcast %cst_65 : f32 to vector<8x128xf32>
    %412 = vector.broadcast %cst_66 : f32 to vector<8x128xf32>
    %413 = arith.select %410, %411, %412 : vector<8x128xi1>, vector<8x128xf32>
    %414 = vector.broadcast %25 : f32 to vector<8x128xf32>
    %415 = arith.mulf %414, %413 : vector<8x128xf32>
    %416 = vector.broadcast %26 : f32 to vector<8x128xf32>
    %417 = arith.mulf %416, %413 : vector<8x128xf32>
    %418 = vector.broadcast %27 : f32 to vector<8x128xf32>
    %419 = arith.mulf %418, %413 : vector<8x128xf32>
    %420 = arith.mulf %31, %25 : f32
    %421 = arith.subf %28, %420 : f32
    %422 = arith.mulf %31, %26 : f32
    %423 = arith.subf %29, %422 : f32
    %424 = arith.mulf %31, %27 : f32
    %425 = arith.subf %30, %424 : f32
    %426 = arith.mulf %31, %25 : f32
    %427 = arith.addf %28, %426 : f32
    %428 = arith.mulf %31, %26 : f32
    %429 = arith.addf %29, %428 : f32
    %430 = arith.mulf %31, %27 : f32
    %431 = arith.addf %30, %430 : f32
    %432 = vector.broadcast %25 : f32 to vector<8x128xf32>
    %433 = arith.mulf %432, %399 : vector<8x128xf32>
    %434 = vector.broadcast %26 : f32 to vector<8x128xf32>
    %435 = arith.mulf %434, %400 : vector<8x128xf32>
    %436 = arith.addf %433, %435 : vector<8x128xf32>
    %437 = vector.broadcast %27 : f32 to vector<8x128xf32>
    %438 = arith.mulf %437, %398 : vector<8x128xf32>
    %439 = arith.addf %436, %438 : vector<8x128xf32>
    %440 = math.absf %439 : vector<8x128xf32>
    %cst_67 = arith.constant 9.99999971E-10 : f32
    %441 = vector.broadcast %cst_67 : f32 to vector<8x128xf32>
    %442 = arith.cmpf olt, %440, %441 : vector<8x128xf32>
    %cst_68 = arith.constant 0.000000e+00 : f32
    %443 = vector.broadcast %cst_68 : f32 to vector<8x128xf32>
    %444 = arith.cmpf olt, %439, %443 : vector<8x128xf32>
    %cst_69 = arith.constant -9.99999971E-10 : f32
    %cst_70 = arith.constant 9.99999971E-10 : f32
    %445 = vector.broadcast %cst_69 : f32 to vector<8x128xf32>
    %446 = vector.broadcast %cst_70 : f32 to vector<8x128xf32>
    %447 = arith.select %444, %445, %446 : vector<8x128xi1>, vector<8x128xf32>
    %448 = arith.select %442, %447, %439 : vector<8x128xi1>, vector<8x128xf32>
    %cst_71 = arith.constant 0.000000e+00 : f32
    %449 = arith.subf %421, %cst_71 : f32
    %450 = arith.mulf %25, %449 : f32
    %cst_72 = arith.constant 0.000000e+00 : f32
    %451 = arith.subf %423, %cst_72 : f32
    %452 = arith.mulf %26, %451 : f32
    %453 = arith.addf %450, %452 : f32
    %cst_73 = arith.constant 0.000000e+00 : f32
    %454 = arith.subf %425, %cst_73 : f32
    %455 = arith.mulf %27, %454 : f32
    %456 = arith.addf %453, %455 : f32
    %457 = tpu.reciprocal %448 {approx = true} : vector<8x128xf32> -> vector<8x128xf32>
    %458 = arith.mulf %448, %457 : vector<8x128xf32>
    %cst_74 = arith.constant 2.000000e+00 : f32
    %459 = vector.broadcast %cst_74 : f32 to vector<8x128xf32>
    %460 = arith.subf %459, %458 : vector<8x128xf32>
    %461 = arith.mulf %457, %460 : vector<8x128xf32>
    %462 = vector.broadcast %456 : f32 to vector<8x128xf32>
    %463 = arith.mulf %462, %461 : vector<8x128xf32>
    %464 = arith.mulf %463, %399 : vector<8x128xf32>
    %cst_75 = arith.constant 0.000000e+00 : f32
    %465 = vector.broadcast %cst_75 : f32 to vector<8x128xf32>
    %466 = arith.addf %465, %464 : vector<8x128xf32>
    %467 = arith.mulf %463, %400 : vector<8x128xf32>
    %cst_76 = arith.constant 0.000000e+00 : f32
    %468 = vector.broadcast %cst_76 : f32 to vector<8x128xf32>
    %469 = arith.addf %468, %467 : vector<8x128xf32>
    %470 = arith.mulf %463, %398 : vector<8x128xf32>
    %cst_77 = arith.constant 0.000000e+00 : f32
    %471 = vector.broadcast %cst_77 : f32 to vector<8x128xf32>
    %472 = arith.addf %471, %470 : vector<8x128xf32>
    %473 = arith.mulf %415, %399 : vector<8x128xf32>
    %474 = arith.mulf %417, %400 : vector<8x128xf32>
    %475 = arith.addf %473, %474 : vector<8x128xf32>
    %476 = arith.mulf %419, %398 : vector<8x128xf32>
    %477 = arith.addf %475, %476 : vector<8x128xf32>
    %cst_78 = arith.constant 0.000000e+00 : f32
    %478 = vector.broadcast %cst_78 : f32 to vector<8x128xf32>
    %479 = arith.subf %478, %477 : vector<8x128xf32>
    %480 = arith.mulf %33, %33 : f32
    %481 = arith.mulf %479, %479 : vector<8x128xf32>
    %cst_79 = arith.constant 1.000000e+00 : f32
    %482 = vector.broadcast %cst_79 : f32 to vector<8x128xf32>
    %483 = arith.subf %482, %481 : vector<8x128xf32>
    %484 = vector.broadcast %480 : f32 to vector<8x128xf32>
    %485 = arith.mulf %484, %483 : vector<8x128xf32>
    %cst_80 = arith.constant 1.000000e+00 : f32
    %486 = vector.broadcast %cst_80 : f32 to vector<8x128xf32>
    %487 = arith.subf %486, %485 : vector<8x128xf32>
    %cst_81 = arith.constant 0.000000e+00 : f32
    %488 = vector.broadcast %cst_81 : f32 to vector<8x128xf32>
    %489 = arith.maximumf %487, %488 : vector<8x128xf32>
    %490 = vector.broadcast %33 : f32 to vector<8x128xf32>
    %491 = arith.mulf %490, %479 : vector<8x128xf32>
    %492 = math.sqrt %489 : vector<8x128xf32>
    %493 = arith.subf %491, %492 : vector<8x128xf32>
    %494 = vector.broadcast %33 : f32 to vector<8x128xf32>
    %495 = arith.mulf %494, %399 : vector<8x128xf32>
    %496 = arith.mulf %493, %415 : vector<8x128xf32>
    %497 = arith.addf %495, %496 : vector<8x128xf32>
    %498 = vector.broadcast %33 : f32 to vector<8x128xf32>
    %499 = arith.mulf %498, %400 : vector<8x128xf32>
    %500 = arith.mulf %493, %417 : vector<8x128xf32>
    %501 = arith.addf %499, %500 : vector<8x128xf32>
    %502 = vector.broadcast %33 : f32 to vector<8x128xf32>
    %503 = arith.mulf %502, %398 : vector<8x128xf32>
    %504 = arith.mulf %493, %419 : vector<8x128xf32>
    %505 = arith.addf %503, %504 : vector<8x128xf32>
    %506 = vector.broadcast %25 : f32 to vector<8x128xf32>
    %507 = arith.mulf %506, %497 : vector<8x128xf32>
    %508 = vector.broadcast %26 : f32 to vector<8x128xf32>
    %509 = arith.mulf %508, %501 : vector<8x128xf32>
    %510 = arith.addf %507, %509 : vector<8x128xf32>
    %511 = vector.broadcast %27 : f32 to vector<8x128xf32>
    %512 = arith.mulf %511, %505 : vector<8x128xf32>
    %513 = arith.addf %510, %512 : vector<8x128xf32>
    %514 = math.absf %513 : vector<8x128xf32>
    %cst_82 = arith.constant 9.99999971E-10 : f32
    %515 = vector.broadcast %cst_82 : f32 to vector<8x128xf32>
    %516 = arith.cmpf olt, %514, %515 : vector<8x128xf32>
    %cst_83 = arith.constant 0.000000e+00 : f32
    %517 = vector.broadcast %cst_83 : f32 to vector<8x128xf32>
    %518 = arith.cmpf olt, %513, %517 : vector<8x128xf32>
    %cst_84 = arith.constant -9.99999971E-10 : f32
    %cst_85 = arith.constant 9.99999971E-10 : f32
    %519 = vector.broadcast %cst_84 : f32 to vector<8x128xf32>
    %520 = vector.broadcast %cst_85 : f32 to vector<8x128xf32>
    %521 = arith.select %518, %519, %520 : vector<8x128xi1>, vector<8x128xf32>
    %522 = arith.select %516, %521, %513 : vector<8x128xi1>, vector<8x128xf32>
    %523 = vector.broadcast %427 : f32 to vector<8x128xf32>
    %524 = arith.subf %523, %466 : vector<8x128xf32>
    %525 = vector.broadcast %25 : f32 to vector<8x128xf32>
    %526 = arith.mulf %525, %524 : vector<8x128xf32>
    %527 = vector.broadcast %429 : f32 to vector<8x128xf32>
    %528 = arith.subf %527, %469 : vector<8x128xf32>
    %529 = vector.broadcast %26 : f32 to vector<8x128xf32>
    %530 = arith.mulf %529, %528 : vector<8x128xf32>
    %531 = arith.addf %526, %530 : vector<8x128xf32>
    %532 = vector.broadcast %431 : f32 to vector<8x128xf32>
    %533 = arith.subf %532, %472 : vector<8x128xf32>
    %534 = vector.broadcast %27 : f32 to vector<8x128xf32>
    %535 = arith.mulf %534, %533 : vector<8x128xf32>
    %536 = arith.addf %531, %535 : vector<8x128xf32>
    %537 = tpu.reciprocal %522 {approx = true} : vector<8x128xf32> -> vector<8x128xf32>
    %538 = arith.mulf %522, %537 : vector<8x128xf32>
    %cst_86 = arith.constant 2.000000e+00 : f32
    %539 = vector.broadcast %cst_86 : f32 to vector<8x128xf32>
    %540 = arith.subf %539, %538 : vector<8x128xf32>
    %541 = arith.mulf %537, %540 : vector<8x128xf32>
    %542 = arith.mulf %536, %541 : vector<8x128xf32>
    %543 = arith.mulf %542, %497 : vector<8x128xf32>
    %544 = arith.addf %466, %543 : vector<8x128xf32>
    %545 = arith.mulf %542, %501 : vector<8x128xf32>
    %546 = arith.addf %469, %545 : vector<8x128xf32>
    %547 = arith.mulf %542, %505 : vector<8x128xf32>
    %548 = arith.addf %472, %547 : vector<8x128xf32>
    %549 = arith.mulf %415, %497 : vector<8x128xf32>
    %550 = arith.mulf %417, %501 : vector<8x128xf32>
    %551 = arith.addf %549, %550 : vector<8x128xf32>
    %552 = arith.mulf %419, %505 : vector<8x128xf32>
    %553 = arith.addf %551, %552 : vector<8x128xf32>
    %cst_87 = arith.constant 0.000000e+00 : f32
    %554 = vector.broadcast %cst_87 : f32 to vector<8x128xf32>
    %555 = arith.subf %554, %553 : vector<8x128xf32>
    %556 = arith.mulf %32, %32 : f32
    %557 = arith.mulf %555, %555 : vector<8x128xf32>
    %cst_88 = arith.constant 1.000000e+00 : f32
    %558 = vector.broadcast %cst_88 : f32 to vector<8x128xf32>
    %559 = arith.subf %558, %557 : vector<8x128xf32>
    %560 = vector.broadcast %556 : f32 to vector<8x128xf32>
    %561 = arith.mulf %560, %559 : vector<8x128xf32>
    %cst_89 = arith.constant 1.000000e+00 : f32
    %562 = vector.broadcast %cst_89 : f32 to vector<8x128xf32>
    %563 = arith.subf %562, %561 : vector<8x128xf32>
    %cst_90 = arith.constant 0.000000e+00 : f32
    %564 = vector.broadcast %cst_90 : f32 to vector<8x128xf32>
    %565 = arith.maximumf %563, %564 : vector<8x128xf32>
    %566 = vector.broadcast %32 : f32 to vector<8x128xf32>
    %567 = arith.mulf %566, %555 : vector<8x128xf32>
    %568 = math.sqrt %565 : vector<8x128xf32>
    %569 = arith.subf %567, %568 : vector<8x128xf32>
    %570 = vector.broadcast %32 : f32 to vector<8x128xf32>
    %571 = arith.mulf %570, %497 : vector<8x128xf32>
    %572 = arith.mulf %569, %415 : vector<8x128xf32>
    %573 = arith.addf %571, %572 : vector<8x128xf32>
    %574 = vector.broadcast %32 : f32 to vector<8x128xf32>
    %575 = arith.mulf %574, %501 : vector<8x128xf32>
    %576 = arith.mulf %569, %417 : vector<8x128xf32>
    %577 = arith.addf %575, %576 : vector<8x128xf32>
    %578 = vector.broadcast %32 : f32 to vector<8x128xf32>
    %579 = arith.mulf %578, %505 : vector<8x128xf32>
    %580 = arith.mulf %569, %419 : vector<8x128xf32>
    %581 = arith.addf %579, %580 : vector<8x128xf32>
    %cst_91 = arith.constant 0.000000e+00 : f32
    %582 = vector.broadcast %cst_91 : f32 to vector<8x128xf32>
    %583 = arith.subf %582, %463 : vector<8x128xf32>
    %cst_92 = arith.constant 0.000000e+00 : f32
    %584 = vector.broadcast %cst_92 : f32 to vector<8x128xf32>
    %585 = arith.maximumf %583, %584 : vector<8x128xf32>
    %cst_93 = arith.constant 0.000000e+00 : f32
    %586 = vector.broadcast %cst_93 : f32 to vector<8x128xf32>
    %587 = arith.subf %586, %542 : vector<8x128xf32>
    %cst_94 = arith.constant 0.000000e+00 : f32
    %588 = vector.broadcast %cst_94 : f32 to vector<8x128xf32>
    %589 = arith.maximumf %587, %588 : vector<8x128xf32>
    %590 = arith.addf %585, %589 : vector<8x128xf32>
    %591 = arith.mulf %106, %106 : vector<8x128xf32>
    %592 = arith.mulf %107, %107 : vector<8x128xf32>
    %593 = arith.addf %591, %592 : vector<8x128xf32>
    %cst_95 = arith.constant 1.000000e+00 : f32
    %594 = vector.broadcast %cst_95 : f32 to vector<8x128xf32>
    %595 = arith.addf %593, %594 : vector<8x128xf32>
    %596 = math.rsqrt %595 : vector<8x128xf32>
    %597 = arith.mulf %106, %596 : vector<8x128xf32>
    %598 = arith.mulf %107, %596 : vector<8x128xf32>
    %599 = vector.broadcast %10 : f32 to vector<8x128xf32>
    %600 = arith.mulf %599, %597 : vector<8x128xf32>
    %601 = vector.broadcast %13 : f32 to vector<8x128xf32>
    %602 = arith.mulf %601, %598 : vector<8x128xf32>
    %603 = arith.addf %600, %602 : vector<8x128xf32>
    %604 = vector.broadcast %16 : f32 to vector<8x128xf32>
    %605 = arith.mulf %604, %596 : vector<8x128xf32>
    %606 = arith.addf %603, %605 : vector<8x128xf32>
    %607 = vector.broadcast %11 : f32 to vector<8x128xf32>
    %608 = arith.mulf %607, %597 : vector<8x128xf32>
    %609 = vector.broadcast %14 : f32 to vector<8x128xf32>
    %610 = arith.mulf %609, %598 : vector<8x128xf32>
    %611 = arith.addf %608, %610 : vector<8x128xf32>
    %612 = vector.broadcast %17 : f32 to vector<8x128xf32>
    %613 = arith.mulf %612, %596 : vector<8x128xf32>
    %614 = arith.addf %611, %613 : vector<8x128xf32>
    %615 = vector.broadcast %12 : f32 to vector<8x128xf32>
    %616 = arith.mulf %615, %597 : vector<8x128xf32>
    %617 = vector.broadcast %15 : f32 to vector<8x128xf32>
    %618 = arith.mulf %617, %598 : vector<8x128xf32>
    %619 = arith.addf %616, %618 : vector<8x128xf32>
    %620 = vector.broadcast %18 : f32 to vector<8x128xf32>
    %621 = arith.mulf %620, %596 : vector<8x128xf32>
    %622 = arith.addf %619, %621 : vector<8x128xf32>
    %623 = vector.broadcast %25 : f32 to vector<8x128xf32>
    %624 = arith.mulf %623, %606 : vector<8x128xf32>
    %625 = vector.broadcast %26 : f32 to vector<8x128xf32>
    %626 = arith.mulf %625, %614 : vector<8x128xf32>
    %627 = arith.addf %624, %626 : vector<8x128xf32>
    %628 = vector.broadcast %27 : f32 to vector<8x128xf32>
    %629 = arith.mulf %628, %622 : vector<8x128xf32>
    %630 = arith.addf %627, %629 : vector<8x128xf32>
    %cst_96 = arith.constant 0.000000e+00 : f32
    %631 = vector.broadcast %cst_96 : f32 to vector<8x128xf32>
    %632 = arith.cmpf ogt, %630, %631 : vector<8x128xf32>
    %cst_97 = arith.constant -1.000000e+00 : f32
    %cst_98 = arith.constant 1.000000e+00 : f32
    %633 = vector.broadcast %cst_97 : f32 to vector<8x128xf32>
    %634 = vector.broadcast %cst_98 : f32 to vector<8x128xf32>
    %635 = arith.select %632, %633, %634 : vector<8x128xi1>, vector<8x128xf32>
    %636 = vector.broadcast %25 : f32 to vector<8x128xf32>
    %637 = arith.mulf %636, %635 : vector<8x128xf32>
    %638 = vector.broadcast %26 : f32 to vector<8x128xf32>
    %639 = arith.mulf %638, %635 : vector<8x128xf32>
    %640 = vector.broadcast %27 : f32 to vector<8x128xf32>
    %641 = arith.mulf %640, %635 : vector<8x128xf32>
    %642 = arith.mulf %31, %25 : f32
    %643 = arith.subf %28, %642 : f32
    %644 = arith.mulf %31, %26 : f32
    %645 = arith.subf %29, %644 : f32
    %646 = arith.mulf %31, %27 : f32
    %647 = arith.subf %30, %646 : f32
    %648 = arith.mulf %31, %25 : f32
    %649 = arith.addf %28, %648 : f32
    %650 = arith.mulf %31, %26 : f32
    %651 = arith.addf %29, %650 : f32
    %652 = arith.mulf %31, %27 : f32
    %653 = arith.addf %30, %652 : f32
    %654 = vector.broadcast %25 : f32 to vector<8x128xf32>
    %655 = arith.mulf %654, %606 : vector<8x128xf32>
    %656 = vector.broadcast %26 : f32 to vector<8x128xf32>
    %657 = arith.mulf %656, %614 : vector<8x128xf32>
    %658 = arith.addf %655, %657 : vector<8x128xf32>
    %659 = vector.broadcast %27 : f32 to vector<8x128xf32>
    %660 = arith.mulf %659, %622 : vector<8x128xf32>
    %661 = arith.addf %658, %660 : vector<8x128xf32>
    %662 = math.absf %661 : vector<8x128xf32>
    %cst_99 = arith.constant 9.99999971E-10 : f32
    %663 = vector.broadcast %cst_99 : f32 to vector<8x128xf32>
    %664 = arith.cmpf olt, %662, %663 : vector<8x128xf32>
    %cst_100 = arith.constant 0.000000e+00 : f32
    %665 = vector.broadcast %cst_100 : f32 to vector<8x128xf32>
    %666 = arith.cmpf olt, %661, %665 : vector<8x128xf32>
    %cst_101 = arith.constant -9.99999971E-10 : f32
    %cst_102 = arith.constant 9.99999971E-10 : f32
    %667 = vector.broadcast %cst_101 : f32 to vector<8x128xf32>
    %668 = vector.broadcast %cst_102 : f32 to vector<8x128xf32>
    %669 = arith.select %666, %667, %668 : vector<8x128xi1>, vector<8x128xf32>
    %670 = arith.select %664, %669, %661 : vector<8x128xi1>, vector<8x128xf32>
    %671 = arith.subf %643, %22 : f32
    %672 = arith.mulf %25, %671 : f32
    %673 = arith.subf %645, %23 : f32
    %674 = arith.mulf %26, %673 : f32
    %675 = arith.addf %672, %674 : f32
    %676 = arith.subf %647, %24 : f32
    %677 = arith.mulf %27, %676 : f32
    %678 = arith.addf %675, %677 : f32
    %679 = tpu.reciprocal %670 {approx = true} : vector<8x128xf32> -> vector<8x128xf32>
    %680 = arith.mulf %670, %679 : vector<8x128xf32>
    %cst_103 = arith.constant 2.000000e+00 : f32
    %681 = vector.broadcast %cst_103 : f32 to vector<8x128xf32>
    %682 = arith.subf %681, %680 : vector<8x128xf32>
    %683 = arith.mulf %679, %682 : vector<8x128xf32>
    %684 = vector.broadcast %678 : f32 to vector<8x128xf32>
    %685 = arith.mulf %684, %683 : vector<8x128xf32>
    %686 = arith.mulf %685, %606 : vector<8x128xf32>
    %687 = vector.broadcast %22 : f32 to vector<8x128xf32>
    %688 = arith.addf %687, %686 : vector<8x128xf32>
    %689 = arith.mulf %685, %614 : vector<8x128xf32>
    %690 = vector.broadcast %23 : f32 to vector<8x128xf32>
    %691 = arith.addf %690, %689 : vector<8x128xf32>
    %692 = arith.mulf %685, %622 : vector<8x128xf32>
    %693 = vector.broadcast %24 : f32 to vector<8x128xf32>
    %694 = arith.addf %693, %692 : vector<8x128xf32>
    %695 = arith.mulf %637, %606 : vector<8x128xf32>
    %696 = arith.mulf %639, %614 : vector<8x128xf32>
    %697 = arith.addf %695, %696 : vector<8x128xf32>
    %698 = arith.mulf %641, %622 : vector<8x128xf32>
    %699 = arith.addf %697, %698 : vector<8x128xf32>
    %cst_104 = arith.constant 0.000000e+00 : f32
    %700 = vector.broadcast %cst_104 : f32 to vector<8x128xf32>
    %701 = arith.subf %700, %699 : vector<8x128xf32>
    %702 = arith.mulf %33, %33 : f32
    %703 = arith.mulf %701, %701 : vector<8x128xf32>
    %cst_105 = arith.constant 1.000000e+00 : f32
    %704 = vector.broadcast %cst_105 : f32 to vector<8x128xf32>
    %705 = arith.subf %704, %703 : vector<8x128xf32>
    %706 = vector.broadcast %702 : f32 to vector<8x128xf32>
    %707 = arith.mulf %706, %705 : vector<8x128xf32>
    %cst_106 = arith.constant 1.000000e+00 : f32
    %708 = vector.broadcast %cst_106 : f32 to vector<8x128xf32>
    %709 = arith.subf %708, %707 : vector<8x128xf32>
    %cst_107 = arith.constant 0.000000e+00 : f32
    %710 = vector.broadcast %cst_107 : f32 to vector<8x128xf32>
    %711 = arith.maximumf %709, %710 : vector<8x128xf32>
    %712 = vector.broadcast %33 : f32 to vector<8x128xf32>
    %713 = arith.mulf %712, %701 : vector<8x128xf32>
    %714 = math.sqrt %711 : vector<8x128xf32>
    %715 = arith.subf %713, %714 : vector<8x128xf32>
    %716 = vector.broadcast %33 : f32 to vector<8x128xf32>
    %717 = arith.mulf %716, %606 : vector<8x128xf32>
    %718 = arith.mulf %715, %637 : vector<8x128xf32>
    %719 = arith.addf %717, %718 : vector<8x128xf32>
    %720 = vector.broadcast %33 : f32 to vector<8x128xf32>
    %721 = arith.mulf %720, %614 : vector<8x128xf32>
    %722 = arith.mulf %715, %639 : vector<8x128xf32>
    %723 = arith.addf %721, %722 : vector<8x128xf32>
    %724 = vector.broadcast %33 : f32 to vector<8x128xf32>
    %725 = arith.mulf %724, %622 : vector<8x128xf32>
    %726 = arith.mulf %715, %641 : vector<8x128xf32>
    %727 = arith.addf %725, %726 : vector<8x128xf32>
    %728 = vector.broadcast %25 : f32 to vector<8x128xf32>
    %729 = arith.mulf %728, %719 : vector<8x128xf32>
    %730 = vector.broadcast %26 : f32 to vector<8x128xf32>
    %731 = arith.mulf %730, %723 : vector<8x128xf32>
    %732 = arith.addf %729, %731 : vector<8x128xf32>
    %733 = vector.broadcast %27 : f32 to vector<8x128xf32>
    %734 = arith.mulf %733, %727 : vector<8x128xf32>
    %735 = arith.addf %732, %734 : vector<8x128xf32>
    %736 = math.absf %735 : vector<8x128xf32>
    %cst_108 = arith.constant 9.99999971E-10 : f32
    %737 = vector.broadcast %cst_108 : f32 to vector<8x128xf32>
    %738 = arith.cmpf olt, %736, %737 : vector<8x128xf32>
    %cst_109 = arith.constant 0.000000e+00 : f32
    %739 = vector.broadcast %cst_109 : f32 to vector<8x128xf32>
    %740 = arith.cmpf olt, %735, %739 : vector<8x128xf32>
    %cst_110 = arith.constant -9.99999971E-10 : f32
    %cst_111 = arith.constant 9.99999971E-10 : f32
    %741 = vector.broadcast %cst_110 : f32 to vector<8x128xf32>
    %742 = vector.broadcast %cst_111 : f32 to vector<8x128xf32>
    %743 = arith.select %740, %741, %742 : vector<8x128xi1>, vector<8x128xf32>
    %744 = arith.select %738, %743, %735 : vector<8x128xi1>, vector<8x128xf32>
    %745 = vector.broadcast %649 : f32 to vector<8x128xf32>
    %746 = arith.subf %745, %688 : vector<8x128xf32>
    %747 = vector.broadcast %25 : f32 to vector<8x128xf32>
    %748 = arith.mulf %747, %746 : vector<8x128xf32>
    %749 = vector.broadcast %651 : f32 to vector<8x128xf32>
    %750 = arith.subf %749, %691 : vector<8x128xf32>
    %751 = vector.broadcast %26 : f32 to vector<8x128xf32>
    %752 = arith.mulf %751, %750 : vector<8x128xf32>
    %753 = arith.addf %748, %752 : vector<8x128xf32>
    %754 = vector.broadcast %653 : f32 to vector<8x128xf32>
    %755 = arith.subf %754, %694 : vector<8x128xf32>
    %756 = vector.broadcast %27 : f32 to vector<8x128xf32>
    %757 = arith.mulf %756, %755 : vector<8x128xf32>
    %758 = arith.addf %753, %757 : vector<8x128xf32>
    %759 = tpu.reciprocal %744 {approx = true} : vector<8x128xf32> -> vector<8x128xf32>
    %760 = arith.mulf %744, %759 : vector<8x128xf32>
    %cst_112 = arith.constant 2.000000e+00 : f32
    %761 = vector.broadcast %cst_112 : f32 to vector<8x128xf32>
    %762 = arith.subf %761, %760 : vector<8x128xf32>
    %763 = arith.mulf %759, %762 : vector<8x128xf32>
    %764 = arith.mulf %758, %763 : vector<8x128xf32>
    %765 = arith.mulf %764, %719 : vector<8x128xf32>
    %766 = arith.addf %688, %765 : vector<8x128xf32>
    %767 = arith.mulf %764, %723 : vector<8x128xf32>
    %768 = arith.addf %691, %767 : vector<8x128xf32>
    %769 = arith.mulf %764, %727 : vector<8x128xf32>
    %770 = arith.addf %694, %769 : vector<8x128xf32>
    %771 = arith.mulf %637, %719 : vector<8x128xf32>
    %772 = arith.mulf %639, %723 : vector<8x128xf32>
    %773 = arith.addf %771, %772 : vector<8x128xf32>
    %774 = arith.mulf %641, %727 : vector<8x128xf32>
    %775 = arith.addf %773, %774 : vector<8x128xf32>
    %cst_113 = arith.constant 0.000000e+00 : f32
    %776 = vector.broadcast %cst_113 : f32 to vector<8x128xf32>
    %777 = arith.subf %776, %775 : vector<8x128xf32>
    %778 = arith.mulf %32, %32 : f32
    %779 = arith.mulf %777, %777 : vector<8x128xf32>
    %cst_114 = arith.constant 1.000000e+00 : f32
    %780 = vector.broadcast %cst_114 : f32 to vector<8x128xf32>
    %781 = arith.subf %780, %779 : vector<8x128xf32>
    %782 = vector.broadcast %778 : f32 to vector<8x128xf32>
    %783 = arith.mulf %782, %781 : vector<8x128xf32>
    %cst_115 = arith.constant 1.000000e+00 : f32
    %784 = vector.broadcast %cst_115 : f32 to vector<8x128xf32>
    %785 = arith.subf %784, %783 : vector<8x128xf32>
    %cst_116 = arith.constant 0.000000e+00 : f32
    %786 = vector.broadcast %cst_116 : f32 to vector<8x128xf32>
    %787 = arith.maximumf %785, %786 : vector<8x128xf32>
    %788 = vector.broadcast %32 : f32 to vector<8x128xf32>
    %789 = arith.mulf %788, %777 : vector<8x128xf32>
    %790 = math.sqrt %787 : vector<8x128xf32>
    %791 = arith.subf %789, %790 : vector<8x128xf32>
    %792 = vector.broadcast %32 : f32 to vector<8x128xf32>
    %793 = arith.mulf %792, %719 : vector<8x128xf32>
    %794 = arith.mulf %791, %637 : vector<8x128xf32>
    %795 = arith.addf %793, %794 : vector<8x128xf32>
    %796 = vector.broadcast %32 : f32 to vector<8x128xf32>
    %797 = arith.mulf %796, %723 : vector<8x128xf32>
    %798 = arith.mulf %791, %639 : vector<8x128xf32>
    %799 = arith.addf %797, %798 : vector<8x128xf32>
    %800 = vector.broadcast %32 : f32 to vector<8x128xf32>
    %801 = arith.mulf %800, %727 : vector<8x128xf32>
    %802 = arith.mulf %791, %641 : vector<8x128xf32>
    %803 = arith.addf %801, %802 : vector<8x128xf32>
    %cst_117 = arith.constant 0.000000e+00 : f32
    %804 = vector.broadcast %cst_117 : f32 to vector<8x128xf32>
    %805 = arith.subf %804, %685 : vector<8x128xf32>
    %cst_118 = arith.constant 0.000000e+00 : f32
    %806 = vector.broadcast %cst_118 : f32 to vector<8x128xf32>
    %807 = arith.maximumf %805, %806 : vector<8x128xf32>
    %cst_119 = arith.constant 0.000000e+00 : f32
    %808 = vector.broadcast %cst_119 : f32 to vector<8x128xf32>
    %809 = arith.subf %808, %764 : vector<8x128xf32>
    %cst_120 = arith.constant 0.000000e+00 : f32
    %810 = vector.broadcast %cst_120 : f32 to vector<8x128xf32>
    %811 = arith.maximumf %809, %810 : vector<8x128xf32>
    %812 = arith.addf %807, %811 : vector<8x128xf32>
    %813 = arith.subf %544, %766 : vector<8x128xf32>
    %814 = arith.subf %546, %768 : vector<8x128xf32>
    %815 = arith.subf %548, %770 : vector<8x128xf32>
    %816 = arith.mulf %573, %795 : vector<8x128xf32>
    %817 = arith.mulf %577, %799 : vector<8x128xf32>
    %818 = arith.addf %816, %817 : vector<8x128xf32>
    %819 = arith.mulf %581, %803 : vector<8x128xf32>
    %820 = arith.addf %818, %819 : vector<8x128xf32>
    %821 = arith.mulf %573, %813 : vector<8x128xf32>
    %822 = arith.mulf %577, %814 : vector<8x128xf32>
    %823 = arith.addf %821, %822 : vector<8x128xf32>
    %824 = arith.mulf %581, %815 : vector<8x128xf32>
    %825 = arith.addf %823, %824 : vector<8x128xf32>
    %826 = arith.mulf %795, %813 : vector<8x128xf32>
    %827 = arith.mulf %799, %814 : vector<8x128xf32>
    %828 = arith.addf %826, %827 : vector<8x128xf32>
    %829 = arith.mulf %803, %815 : vector<8x128xf32>
    %830 = arith.addf %828, %829 : vector<8x128xf32>
    %831 = arith.mulf %820, %820 : vector<8x128xf32>
    %cst_121 = arith.constant 1.000000e+00 : f32
    %832 = vector.broadcast %cst_121 : f32 to vector<8x128xf32>
    %833 = arith.subf %832, %831 : vector<8x128xf32>
    %cst_122 = arith.constant 9.99999971E-10 : f32
    %834 = vector.broadcast %cst_122 : f32 to vector<8x128xf32>
    %835 = arith.cmpf olt, %833, %834 : vector<8x128xf32>
    %cst_123 = arith.constant 9.99999971E-10 : f32
    %836 = vector.broadcast %cst_123 : f32 to vector<8x128xf32>
    %837 = arith.select %835, %836, %833 : vector<8x128xi1>, vector<8x128xf32>
    %838 = tpu.reciprocal %837 {approx = true} : vector<8x128xf32> -> vector<8x128xf32>
    %839 = arith.mulf %837, %838 : vector<8x128xf32>
    %cst_124 = arith.constant 2.000000e+00 : f32
    %840 = vector.broadcast %cst_124 : f32 to vector<8x128xf32>
    %841 = arith.subf %840, %839 : vector<8x128xf32>
    %842 = arith.mulf %838, %841 : vector<8x128xf32>
    %843 = arith.mulf %820, %830 : vector<8x128xf32>
    %844 = arith.subf %843, %825 : vector<8x128xf32>
    %845 = arith.mulf %844, %842 : vector<8x128xf32>
    %846 = arith.mulf %820, %825 : vector<8x128xf32>
    %847 = arith.subf %830, %846 : vector<8x128xf32>
    %848 = arith.mulf %847, %842 : vector<8x128xf32>
    %849 = arith.mulf %845, %573 : vector<8x128xf32>
    %850 = arith.addf %544, %849 : vector<8x128xf32>
    %851 = arith.mulf %845, %577 : vector<8x128xf32>
    %852 = arith.addf %546, %851 : vector<8x128xf32>
    %853 = arith.mulf %845, %581 : vector<8x128xf32>
    %854 = arith.addf %548, %853 : vector<8x128xf32>
    %855 = arith.mulf %848, %795 : vector<8x128xf32>
    %856 = arith.addf %766, %855 : vector<8x128xf32>
    %857 = arith.mulf %848, %799 : vector<8x128xf32>
    %858 = arith.addf %768, %857 : vector<8x128xf32>
    %859 = arith.mulf %848, %803 : vector<8x128xf32>
    %860 = arith.addf %770, %859 : vector<8x128xf32>
    %861 = arith.addf %850, %856 : vector<8x128xf32>
    %cst_125 = arith.constant 5.000000e-01 : f32
    %862 = vector.broadcast %cst_125 : f32 to vector<8x128xf32>
    %863 = arith.mulf %861, %862 : vector<8x128xf32>
    %864 = arith.addf %852, %858 : vector<8x128xf32>
    %cst_126 = arith.constant 5.000000e-01 : f32
    %865 = vector.broadcast %cst_126 : f32 to vector<8x128xf32>
    %866 = arith.mulf %864, %865 : vector<8x128xf32>
    %867 = arith.addf %854, %860 : vector<8x128xf32>
    %cst_127 = arith.constant 5.000000e-01 : f32
    %868 = vector.broadcast %cst_127 : f32 to vector<8x128xf32>
    %869 = arith.mulf %867, %868 : vector<8x128xf32>
    %870 = arith.subf %850, %856 : vector<8x128xf32>
    %871 = arith.subf %852, %858 : vector<8x128xf32>
    %872 = arith.subf %854, %860 : vector<8x128xf32>
    %873 = arith.mulf %870, %870 : vector<8x128xf32>
    %874 = arith.mulf %871, %871 : vector<8x128xf32>
    %875 = arith.addf %873, %874 : vector<8x128xf32>
    %876 = arith.mulf %872, %872 : vector<8x128xf32>
    %877 = arith.addf %875, %876 : vector<8x128xf32>
    %cst_128 = arith.constant 9.99999993E-9 : f32
    %878 = vector.broadcast %cst_128 : f32 to vector<8x128xf32>
    %879 = arith.addf %877, %878 : vector<8x128xf32>
    %880 = math.sqrt %879 : vector<8x128xf32>
    %c16_129 = arith.constant 16 : index
    %881 = arith.index_cast %38 : i32 to index
    %c0_130 = arith.constant 0 : index
    %882 = vector.load %arg5[%c16_129, %881, %c0_130] : memref<19x8x128xf32, #tpu.memory_space<vmem>>, vector<1x8x128xf32>
    %883 = vector.shape_cast %882 : vector<1x8x128xf32> to vector<8x128xf32>
    %884 = vector.shape_cast %880 : vector<8x128xf32> to vector<1x8x128xf32>
    tpu.vector_store %arg5[%c16_129, %881, %c0_130], %884 {strides = array<i32>} : memref<19x8x128xf32, #tpu.memory_space<vmem>>, vector<1x8x128xf32>,
    %885 = math.absf %869 : vector<8x128xf32>
    %cst_131 = arith.constant 9.99999971E-10 : f32
    %886 = vector.broadcast %cst_131 : f32 to vector<8x128xf32>
    %887 = arith.cmpf olt, %885, %886 : vector<8x128xf32>
    %cst_132 = arith.constant 0.000000e+00 : f32
    %888 = vector.broadcast %cst_132 : f32 to vector<8x128xf32>
    %889 = arith.cmpf olt, %869, %888 : vector<8x128xf32>
    %cst_133 = arith.constant -9.99999971E-10 : f32
    %cst_134 = arith.constant 9.99999971E-10 : f32
    %890 = vector.broadcast %cst_133 : f32 to vector<8x128xf32>
    %891 = vector.broadcast %cst_134 : f32 to vector<8x128xf32>
    %892 = arith.select %889, %890, %891 : vector<8x128xi1>, vector<8x128xf32>
    %893 = arith.select %887, %892, %869 : vector<8x128xi1>, vector<8x128xf32>
    %894 = tpu.reciprocal %893 {approx = true} : vector<8x128xf32> -> vector<8x128xf32>
    %895 = arith.mulf %893, %894 : vector<8x128xf32>
    %cst_135 = arith.constant 2.000000e+00 : f32
    %896 = vector.broadcast %cst_135 : f32 to vector<8x128xf32>
    %897 = arith.subf %896, %895 : vector<8x128xf32>
    %898 = arith.mulf %894, %897 : vector<8x128xf32>
    %899 = arith.mulf %863, %898 : vector<8x128xf32>
    %900 = arith.mulf %866, %898 : vector<8x128xf32>
    %901 = arith.mulf %899, %899 : vector<8x128xf32>
    %902 = arith.mulf %900, %900 : vector<8x128xf32>
    %903 = arith.addf %901, %902 : vector<8x128xf32>
    %904 = vector.broadcast %4 : f32 to vector<8x128xf32>
    %905 = arith.mulf %904, %903 : vector<8x128xf32>
    %cst_136 = arith.constant 1.000000e+00 : f32
    %906 = vector.broadcast %cst_136 : f32 to vector<8x128xf32>
    %907 = arith.addf %906, %905 : vector<8x128xf32>
    %908 = vector.broadcast %2 : f32 to vector<8x128xf32>
    %909 = arith.mulf %908, %899 : vector<8x128xf32>
    %910 = arith.mulf %909, %907 : vector<8x128xf32>
    %911 = vector.broadcast %0 : f32 to vector<8x128xf32>
    %912 = arith.addf %911, %910 : vector<8x128xf32>
    %913 = vector.broadcast %2 : f32 to vector<8x128xf32>
    %914 = arith.mulf %913, %900 : vector<8x128xf32>
    %915 = arith.mulf %914, %907 : vector<8x128xf32>
    %916 = vector.broadcast %1 : f32 to vector<8x128xf32>
    %917 = arith.addf %916, %915 : vector<8x128xf32>
    %c7_137 = arith.constant 7 : index
    %918 = arith.index_cast %38 : i32 to index
    %c0_138 = arith.constant 0 : index
    %919 = vector.load %arg5[%c7_137, %918, %c0_138] : memref<19x8x128xf32, #tpu.memory_space<vmem>>, vector<1x8x128xf32>
    %920 = vector.shape_cast %919 : vector<1x8x128xf32> to vector<8x128xf32>
    %921 = vector.shape_cast %912 : vector<8x128xf32> to vector<1x8x128xf32>
    tpu.vector_store %arg5[%c7_137, %918, %c0_138], %921 {strides = array<i32>} : memref<19x8x128xf32, #tpu.memory_space<vmem>>, vector<1x8x128xf32>,
    %c8_139 = arith.constant 8 : index
    %922 = arith.index_cast %38 : i32 to index
    %c0_140 = arith.constant 0 : index
    %923 = vector.load %arg5[%c8_139, %922, %c0_140] : memref<19x8x128xf32, #tpu.memory_space<vmem>>, vector<1x8x128xf32>
    %924 = vector.shape_cast %923 : vector<1x8x128xf32> to vector<8x128xf32>
    %925 = vector.shape_cast %917 : vector<8x128xf32> to vector<1x8x128xf32>
    tpu.vector_store %arg5[%c8_139, %922, %c0_140], %925 {strides = array<i32>} : memref<19x8x128xf32, #tpu.memory_space<vmem>>, vector<1x8x128xf32>,
    %926 = vector.broadcast %10 : f32 to vector<8x128xf32>
    %927 = arith.mulf %926, %863 : vector<8x128xf32>
    %928 = vector.broadcast %11 : f32 to vector<8x128xf32>
    %929 = arith.mulf %928, %866 : vector<8x128xf32>
    %930 = arith.addf %927, %929 : vector<8x128xf32>
    %931 = vector.broadcast %12 : f32 to vector<8x128xf32>
    %932 = arith.mulf %931, %869 : vector<8x128xf32>
    %933 = arith.addf %930, %932 : vector<8x128xf32>
    %934 = vector.broadcast %19 : f32 to vector<8x128xf32>
    %935 = arith.addf %933, %934 : vector<8x128xf32>
    %936 = vector.broadcast %13 : f32 to vector<8x128xf32>
    %937 = arith.mulf %936, %863 : vector<8x128xf32>
    %938 = vector.broadcast %14 : f32 to vector<8x128xf32>
    %939 = arith.mulf %938, %866 : vector<8x128xf32>
    %940 = arith.addf %937, %939 : vector<8x128xf32>
    %941 = vector.broadcast %15 : f32 to vector<8x128xf32>
    %942 = arith.mulf %941, %869 : vector<8x128xf32>
    %943 = arith.addf %940, %942 : vector<8x128xf32>
    %944 = vector.broadcast %20 : f32 to vector<8x128xf32>
    %945 = arith.addf %943, %944 : vector<8x128xf32>
    %946 = vector.broadcast %16 : f32 to vector<8x128xf32>
    %947 = arith.mulf %946, %863 : vector<8x128xf32>
    %948 = vector.broadcast %17 : f32 to vector<8x128xf32>
    %949 = arith.mulf %948, %866 : vector<8x128xf32>
    %950 = arith.addf %947, %949 : vector<8x128xf32>
    %951 = vector.broadcast %18 : f32 to vector<8x128xf32>
    %952 = arith.mulf %951, %869 : vector<8x128xf32>
    %953 = arith.addf %950, %952 : vector<8x128xf32>
    %954 = vector.broadcast %21 : f32 to vector<8x128xf32>
    %955 = arith.addf %953, %954 : vector<8x128xf32>
    %956 = math.absf %955 : vector<8x128xf32>
    %cst_141 = arith.constant 9.99999971E-10 : f32
    %957 = vector.broadcast %cst_141 : f32 to vector<8x128xf32>
    %958 = arith.cmpf olt, %956, %957 : vector<8x128xf32>
    %cst_142 = arith.constant 0.000000e+00 : f32
    %959 = vector.broadcast %cst_142 : f32 to vector<8x128xf32>
    %960 = arith.cmpf olt, %955, %959 : vector<8x128xf32>
    %cst_143 = arith.constant -9.99999971E-10 : f32
    %cst_144 = arith.constant 9.99999971E-10 : f32
    %961 = vector.broadcast %cst_143 : f32 to vector<8x128xf32>
    %962 = vector.broadcast %cst_144 : f32 to vector<8x128xf32>
    %963 = arith.select %960, %961, %962 : vector<8x128xi1>, vector<8x128xf32>
    %964 = arith.select %958, %963, %955 : vector<8x128xi1>, vector<8x128xf32>
    %965 = tpu.reciprocal %964 {approx = true} : vector<8x128xf32> -> vector<8x128xf32>
    %966 = arith.mulf %964, %965 : vector<8x128xf32>
    %cst_145 = arith.constant 2.000000e+00 : f32
    %967 = vector.broadcast %cst_145 : f32 to vector<8x128xf32>
    %968 = arith.subf %967, %966 : vector<8x128xf32>
    %969 = arith.mulf %965, %968 : vector<8x128xf32>
    %970 = arith.mulf %935, %969 : vector<8x128xf32>
    %971 = arith.mulf %945, %969 : vector<8x128xf32>
    %972 = arith.mulf %970, %970 : vector<8x128xf32>
    %973 = arith.mulf %971, %971 : vector<8x128xf32>
    %974 = arith.addf %972, %973 : vector<8x128xf32>
    %975 = vector.broadcast %9 : f32 to vector<8x128xf32>
    %976 = arith.mulf %975, %974 : vector<8x128xf32>
    %cst_146 = arith.constant 1.000000e+00 : f32
    %977 = vector.broadcast %cst_146 : f32 to vector<8x128xf32>
    %978 = arith.addf %977, %976 : vector<8x128xf32>
    %979 = vector.broadcast %7 : f32 to vector<8x128xf32>
    %980 = arith.mulf %979, %970 : vector<8x128xf32>
    %981 = arith.mulf %980, %978 : vector<8x128xf32>
    %982 = vector.broadcast %5 : f32 to vector<8x128xf32>
    %983 = arith.addf %982, %981 : vector<8x128xf32>
    %984 = vector.broadcast %7 : f32 to vector<8x128xf32>
    %985 = arith.mulf %984, %971 : vector<8x128xf32>
    %986 = arith.mulf %985, %978 : vector<8x128xf32>
    %987 = vector.broadcast %6 : f32 to vector<8x128xf32>
    %988 = arith.addf %987, %986 : vector<8x128xf32>
    %c9_147 = arith.constant 9 : index
    %989 = arith.index_cast %38 : i32 to index
    %c0_148 = arith.constant 0 : index
    %990 = vector.load %arg5[%c9_147, %989, %c0_148] : memref<19x8x128xf32, #tpu.memory_space<vmem>>, vector<1x8x128xf32>
    %991 = vector.shape_cast %990 : vector<1x8x128xf32> to vector<8x128xf32>
    %992 = vector.shape_cast %983 : vector<8x128xf32> to vector<1x8x128xf32>
    tpu.vector_store %arg5[%c9_147, %989, %c0_148], %992 {strides = array<i32>} : memref<19x8x128xf32, #tpu.memory_space<vmem>>, vector<1x8x128xf32>,
    %c10_149 = arith.constant 10 : index
    %993 = arith.index_cast %38 : i32 to index
    %c0_150 = arith.constant 0 : index
    %994 = vector.load %arg5[%c10_149, %993, %c0_150] : memref<19x8x128xf32, #tpu.memory_space<vmem>>, vector<1x8x128xf32>
    %995 = vector.shape_cast %994 : vector<1x8x128xf32> to vector<8x128xf32>
    %996 = vector.shape_cast %988 : vector<8x128xf32> to vector<1x8x128xf32>
    tpu.vector_store %arg5[%c10_149, %993, %c0_150], %996 {strides = array<i32>} : memref<19x8x128xf32, #tpu.memory_space<vmem>>, vector<1x8x128xf32>,
    %997 = vector.broadcast %22 : f32 to vector<8x128xf32>
    %998 = arith.subf %544, %997 : vector<8x128xf32>
    %999 = vector.broadcast %23 : f32 to vector<8x128xf32>
    %1000 = arith.subf %546, %999 : vector<8x128xf32>
    %1001 = vector.broadcast %24 : f32 to vector<8x128xf32>
    %1002 = arith.subf %548, %1001 : vector<8x128xf32>
    %1003 = arith.mulf %573, %180 : vector<8x128xf32>
    %1004 = arith.mulf %577, %188 : vector<8x128xf32>
    %1005 = arith.addf %1003, %1004 : vector<8x128xf32>
    %1006 = arith.mulf %581, %196 : vector<8x128xf32>
    %1007 = arith.addf %1005, %1006 : vector<8x128xf32>
    %1008 = arith.mulf %573, %998 : vector<8x128xf32>
    %1009 = arith.mulf %577, %1000 : vector<8x128xf32>
    %1010 = arith.addf %1008, %1009 : vector<8x128xf32>
    %1011 = arith.mulf %581, %1002 : vector<8x128xf32>
    %1012 = arith.addf %1010, %1011 : vector<8x128xf32>
    %1013 = arith.mulf %180, %998 : vector<8x128xf32>
    %1014 = arith.mulf %188, %1000 : vector<8x128xf32>
    %1015 = arith.addf %1013, %1014 : vector<8x128xf32>
    %1016 = arith.mulf %196, %1002 : vector<8x128xf32>
    %1017 = arith.addf %1015, %1016 : vector<8x128xf32>
    %1018 = arith.mulf %1007, %1007 : vector<8x128xf32>
    %cst_151 = arith.constant 1.000000e+00 : f32
    %1019 = vector.broadcast %cst_151 : f32 to vector<8x128xf32>
    %1020 = arith.subf %1019, %1018 : vector<8x128xf32>
    %cst_152 = arith.constant 9.99999971E-10 : f32
    %1021 = vector.broadcast %cst_152 : f32 to vector<8x128xf32>
    %1022 = arith.cmpf olt, %1020, %1021 : vector<8x128xf32>
    %cst_153 = arith.constant 9.99999971E-10 : f32
    %1023 = vector.broadcast %cst_153 : f32 to vector<8x128xf32>
    %1024 = arith.select %1022, %1023, %1020 : vector<8x128xi1>, vector<8x128xf32>
    %1025 = tpu.reciprocal %1024 {approx = true} : vector<8x128xf32> -> vector<8x128xf32>
    %1026 = arith.mulf %1024, %1025 : vector<8x128xf32>
    %cst_154 = arith.constant 2.000000e+00 : f32
    %1027 = vector.broadcast %cst_154 : f32 to vector<8x128xf32>
    %1028 = arith.subf %1027, %1026 : vector<8x128xf32>
    %1029 = arith.mulf %1025, %1028 : vector<8x128xf32>
    %1030 = arith.mulf %1007, %1017 : vector<8x128xf32>
    %1031 = arith.subf %1030, %1012 : vector<8x128xf32>
    %1032 = arith.mulf %1031, %1029 : vector<8x128xf32>
    %1033 = arith.mulf %1007, %1012 : vector<8x128xf32>
    %1034 = arith.subf %1017, %1033 : vector<8x128xf32>
    %1035 = arith.mulf %1034, %1029 : vector<8x128xf32>
    %1036 = arith.mulf %1032, %573 : vector<8x128xf32>
    %1037 = arith.addf %544, %1036 : vector<8x128xf32>
    %1038 = arith.mulf %1032, %577 : vector<8x128xf32>
    %1039 = arith.addf %546, %1038 : vector<8x128xf32>
    %1040 = arith.mulf %1032, %581 : vector<8x128xf32>
    %1041 = arith.addf %548, %1040 : vector<8x128xf32>
    %1042 = arith.mulf %1035, %180 : vector<8x128xf32>
    %1043 = vector.broadcast %22 : f32 to vector<8x128xf32>
    %1044 = arith.addf %1043, %1042 : vector<8x128xf32>
    %1045 = arith.mulf %1035, %188 : vector<8x128xf32>
    %1046 = vector.broadcast %23 : f32 to vector<8x128xf32>
    %1047 = arith.addf %1046, %1045 : vector<8x128xf32>
    %1048 = arith.mulf %1035, %196 : vector<8x128xf32>
    %1049 = vector.broadcast %24 : f32 to vector<8x128xf32>
    %1050 = arith.addf %1049, %1048 : vector<8x128xf32>
    %1051 = arith.addf %1037, %1044 : vector<8x128xf32>
    %cst_155 = arith.constant 5.000000e-01 : f32
    %1052 = vector.broadcast %cst_155 : f32 to vector<8x128xf32>
    %1053 = arith.mulf %1051, %1052 : vector<8x128xf32>
    %1054 = arith.addf %1039, %1047 : vector<8x128xf32>
    %cst_156 = arith.constant 5.000000e-01 : f32
    %1055 = vector.broadcast %cst_156 : f32 to vector<8x128xf32>
    %1056 = arith.mulf %1054, %1055 : vector<8x128xf32>
    %1057 = arith.addf %1041, %1050 : vector<8x128xf32>
    %cst_157 = arith.constant 5.000000e-01 : f32
    %1058 = vector.broadcast %cst_157 : f32 to vector<8x128xf32>
    %1059 = arith.mulf %1057, %1058 : vector<8x128xf32>
    %1060 = arith.subf %1037, %1044 : vector<8x128xf32>
    %1061 = arith.subf %1039, %1047 : vector<8x128xf32>
    %1062 = arith.subf %1041, %1050 : vector<8x128xf32>
    %1063 = arith.mulf %1060, %1060 : vector<8x128xf32>
    %1064 = arith.mulf %1061, %1061 : vector<8x128xf32>
    %1065 = arith.addf %1063, %1064 : vector<8x128xf32>
    %1066 = arith.mulf %1062, %1062 : vector<8x128xf32>
    %1067 = arith.addf %1065, %1066 : vector<8x128xf32>
    %cst_158 = arith.constant 9.99999993E-9 : f32
    %1068 = vector.broadcast %cst_158 : f32 to vector<8x128xf32>
    %1069 = arith.addf %1067, %1068 : vector<8x128xf32>
    %1070 = math.sqrt %1069 : vector<8x128xf32>
    %c18_159 = arith.constant 18 : index
    %1071 = arith.index_cast %38 : i32 to index
    %c0_160 = arith.constant 0 : index
    %1072 = vector.load %arg5[%c18_159, %1071, %c0_160] : memref<19x8x128xf32, #tpu.memory_space<vmem>>, vector<1x8x128xf32>
    %1073 = vector.shape_cast %1072 : vector<1x8x128xf32> to vector<8x128xf32>
    %1074 = vector.shape_cast %1070 : vector<8x128xf32> to vector<1x8x128xf32>
    tpu.vector_store %arg5[%c18_159, %1071, %c0_160], %1074 {strides = array<i32>} : memref<19x8x128xf32, #tpu.memory_space<vmem>>, vector<1x8x128xf32>,
    %cst_161 = arith.constant 2.000000e+00 : f32
    %1075 = vector.broadcast %cst_161 : f32 to vector<8x128xf32>
    %1076 = arith.mulf %1075, %1070 : vector<8x128xf32>
    %1077 = arith.addf %1076, %276 : vector<8x128xf32>
    %1078 = arith.addf %1077, %880 : vector<8x128xf32>
    %cst_162 = arith.constant 2.500000e-01 : f32
    %1079 = vector.broadcast %cst_162 : f32 to vector<8x128xf32>
    %1080 = arith.mulf %1078, %1079 : vector<8x128xf32>
    %c15_163 = arith.constant 15 : index
    %1081 = arith.index_cast %38 : i32 to index
    %c0_164 = arith.constant 0 : index
    %1082 = vector.load %arg5[%c15_163, %1081, %c0_164] : memref<19x8x128xf32, #tpu.memory_space<vmem>>, vector<1x8x128xf32>
    %1083 = vector.shape_cast %1082 : vector<1x8x128xf32> to vector<8x128xf32>
    %1084 = vector.shape_cast %1080 : vector<8x128xf32> to vector<1x8x128xf32>
    tpu.vector_store %arg5[%c15_163, %1081, %c0_164], %1084 {strides = array<i32>} : memref<19x8x128xf32, #tpu.memory_space<vmem>>, vector<1x8x128xf32>,
    %cst_165 = arith.constant 2.000000e+00 : f32
    %1085 = vector.broadcast %cst_165 : f32 to vector<8x128xf32>
    %1086 = arith.mulf %1085, %1053 : vector<8x128xf32>
    %1087 = arith.addf %259, %1086 : vector<8x128xf32>
    %1088 = arith.addf %1087, %863 : vector<8x128xf32>
    %cst_166 = arith.constant 2.500000e-01 : f32
    %1089 = vector.broadcast %cst_166 : f32 to vector<8x128xf32>
    %1090 = arith.mulf %1088, %1089 : vector<8x128xf32>
    %cst_167 = arith.constant 2.000000e+00 : f32
    %1091 = vector.broadcast %cst_167 : f32 to vector<8x128xf32>
    %1092 = arith.mulf %1091, %1056 : vector<8x128xf32>
    %1093 = arith.addf %262, %1092 : vector<8x128xf32>
    %1094 = arith.addf %1093, %866 : vector<8x128xf32>
    %cst_168 = arith.constant 2.500000e-01 : f32
    %1095 = vector.broadcast %cst_168 : f32 to vector<8x128xf32>
    %1096 = arith.mulf %1094, %1095 : vector<8x128xf32>
    %cst_169 = arith.constant 2.000000e+00 : f32
    %1097 = vector.broadcast %cst_169 : f32 to vector<8x128xf32>
    %1098 = arith.mulf %1097, %1059 : vector<8x128xf32>
    %1099 = arith.addf %265, %1098 : vector<8x128xf32>
    %1100 = arith.addf %1099, %869 : vector<8x128xf32>
    %cst_170 = arith.constant 2.500000e-01 : f32
    %1101 = vector.broadcast %cst_170 : f32 to vector<8x128xf32>
    %1102 = arith.mulf %1100, %1101 : vector<8x128xf32>
    %c0_171 = arith.constant 0 : index
    %1103 = arith.index_cast %38 : i32 to index
    %c0_172 = arith.constant 0 : index
    %1104 = vector.load %arg5[%c0_171, %1103, %c0_172] : memref<19x8x128xf32, #tpu.memory_space<vmem>>, vector<1x8x128xf32>
    %1105 = vector.shape_cast %1104 : vector<1x8x128xf32> to vector<8x128xf32>
    %1106 = vector.shape_cast %1090 : vector<8x128xf32> to vector<1x8x128xf32>
    tpu.vector_store %arg5[%c0_171, %1103, %c0_172], %1106 {strides = array<i32>} : memref<19x8x128xf32, #tpu.memory_space<vmem>>, vector<1x8x128xf32>,
    %c1_173 = arith.constant 1 : index
    %1107 = arith.index_cast %38 : i32 to index
    %c0_174 = arith.constant 0 : index
    %1108 = vector.load %arg5[%c1_173, %1107, %c0_174] : memref<19x8x128xf32, #tpu.memory_space<vmem>>, vector<1x8x128xf32>
    %1109 = vector.shape_cast %1108 : vector<1x8x128xf32> to vector<8x128xf32>
    %1110 = vector.shape_cast %1096 : vector<8x128xf32> to vector<1x8x128xf32>
    tpu.vector_store %arg5[%c1_173, %1107, %c0_174], %1110 {strides = array<i32>} : memref<19x8x128xf32, #tpu.memory_space<vmem>>, vector<1x8x128xf32>,
    %c2_175 = arith.constant 2 : index
    %1111 = arith.index_cast %38 : i32 to index
    %c0_176 = arith.constant 0 : index
    %1112 = vector.load %arg5[%c2_175, %1111, %c0_176] : memref<19x8x128xf32, #tpu.memory_space<vmem>>, vector<1x8x128xf32>
    %1113 = vector.shape_cast %1112 : vector<1x8x128xf32> to vector<8x128xf32>
    %1114 = vector.shape_cast %1102 : vector<8x128xf32> to vector<1x8x128xf32>
    tpu.vector_store %arg5[%c2_175, %1111, %c0_176], %1114 {strides = array<i32>} : memref<19x8x128xf32, #tpu.memory_space<vmem>>, vector<1x8x128xf32>,
    %1115 = math.absf %1102 : vector<8x128xf32>
    %cst_177 = arith.constant 9.99999971E-10 : f32
    %1116 = vector.broadcast %cst_177 : f32 to vector<8x128xf32>
    %1117 = arith.cmpf olt, %1115, %1116 : vector<8x128xf32>
    %cst_178 = arith.constant 0.000000e+00 : f32
    %1118 = vector.broadcast %cst_178 : f32 to vector<8x128xf32>
    %1119 = arith.cmpf olt, %1102, %1118 : vector<8x128xf32>
    %cst_179 = arith.constant -9.99999971E-10 : f32
    %cst_180 = arith.constant 9.99999971E-10 : f32
    %1120 = vector.broadcast %cst_179 : f32 to vector<8x128xf32>
    %1121 = vector.broadcast %cst_180 : f32 to vector<8x128xf32>
    %1122 = arith.select %1119, %1120, %1121 : vector<8x128xi1>, vector<8x128xf32>
    %1123 = arith.select %1117, %1122, %1102 : vector<8x128xi1>, vector<8x128xf32>
    %1124 = tpu.reciprocal %1123 {approx = true} : vector<8x128xf32> -> vector<8x128xf32>
    %1125 = arith.mulf %1123, %1124 : vector<8x128xf32>
    %cst_181 = arith.constant 2.000000e+00 : f32
    %1126 = vector.broadcast %cst_181 : f32 to vector<8x128xf32>
    %1127 = arith.subf %1126, %1125 : vector<8x128xf32>
    %1128 = arith.mulf %1124, %1127 : vector<8x128xf32>
    %1129 = arith.mulf %1090, %1128 : vector<8x128xf32>
    %1130 = arith.mulf %1096, %1128 : vector<8x128xf32>
    %1131 = arith.mulf %1129, %1129 : vector<8x128xf32>
    %1132 = arith.mulf %1130, %1130 : vector<8x128xf32>
    %1133 = arith.addf %1131, %1132 : vector<8x128xf32>
    %1134 = vector.broadcast %4 : f32 to vector<8x128xf32>
    %1135 = arith.mulf %1134, %1133 : vector<8x128xf32>
    %cst_182 = arith.constant 1.000000e+00 : f32
    %1136 = vector.broadcast %cst_182 : f32 to vector<8x128xf32>
    %1137 = arith.addf %1136, %1135 : vector<8x128xf32>
    %1138 = vector.broadcast %2 : f32 to vector<8x128xf32>
    %1139 = arith.mulf %1138, %1129 : vector<8x128xf32>
    %1140 = arith.mulf %1139, %1137 : vector<8x128xf32>
    %1141 = vector.broadcast %0 : f32 to vector<8x128xf32>
    %1142 = arith.addf %1141, %1140 : vector<8x128xf32>
    %1143 = vector.broadcast %2 : f32 to vector<8x128xf32>
    %1144 = arith.mulf %1143, %1130 : vector<8x128xf32>
    %1145 = arith.mulf %1144, %1137 : vector<8x128xf32>
    %1146 = vector.broadcast %1 : f32 to vector<8x128xf32>
    %1147 = arith.addf %1146, %1145 : vector<8x128xf32>
    %c3_183 = arith.constant 3 : index
    %1148 = arith.index_cast %38 : i32 to index
    %c0_184 = arith.constant 0 : index
    %1149 = vector.load %arg5[%c3_183, %1148, %c0_184] : memref<19x8x128xf32, #tpu.memory_space<vmem>>, vector<1x8x128xf32>
    %1150 = vector.shape_cast %1149 : vector<1x8x128xf32> to vector<8x128xf32>
    %1151 = vector.shape_cast %1142 : vector<8x128xf32> to vector<1x8x128xf32>
    tpu.vector_store %arg5[%c3_183, %1148, %c0_184], %1151 {strides = array<i32>} : memref<19x8x128xf32, #tpu.memory_space<vmem>>, vector<1x8x128xf32>,
    %c4_185 = arith.constant 4 : index
    %1152 = arith.index_cast %38 : i32 to index
    %c0_186 = arith.constant 0 : index
    %1153 = vector.load %arg5[%c4_185, %1152, %c0_186] : memref<19x8x128xf32, #tpu.memory_space<vmem>>, vector<1x8x128xf32>
    %1154 = vector.shape_cast %1153 : vector<1x8x128xf32> to vector<8x128xf32>
    %1155 = vector.shape_cast %1147 : vector<8x128xf32> to vector<1x8x128xf32>
    tpu.vector_store %arg5[%c4_185, %1152, %c0_186], %1155 {strides = array<i32>} : memref<19x8x128xf32, #tpu.memory_space<vmem>>, vector<1x8x128xf32>,
    %1156 = vector.broadcast %10 : f32 to vector<8x128xf32>
    %1157 = arith.mulf %1156, %1090 : vector<8x128xf32>
    %1158 = vector.broadcast %11 : f32 to vector<8x128xf32>
    %1159 = arith.mulf %1158, %1096 : vector<8x128xf32>
    %1160 = arith.addf %1157, %1159 : vector<8x128xf32>
    %1161 = vector.broadcast %12 : f32 to vector<8x128xf32>
    %1162 = arith.mulf %1161, %1102 : vector<8x128xf32>
    %1163 = arith.addf %1160, %1162 : vector<8x128xf32>
    %1164 = vector.broadcast %19 : f32 to vector<8x128xf32>
    %1165 = arith.addf %1163, %1164 : vector<8x128xf32>
    %1166 = vector.broadcast %13 : f32 to vector<8x128xf32>
    %1167 = arith.mulf %1166, %1090 : vector<8x128xf32>
    %1168 = vector.broadcast %14 : f32 to vector<8x128xf32>
    %1169 = arith.mulf %1168, %1096 : vector<8x128xf32>
    %1170 = arith.addf %1167, %1169 : vector<8x128xf32>
    %1171 = vector.broadcast %15 : f32 to vector<8x128xf32>
    %1172 = arith.mulf %1171, %1102 : vector<8x128xf32>
    %1173 = arith.addf %1170, %1172 : vector<8x128xf32>
    %1174 = vector.broadcast %20 : f32 to vector<8x128xf32>
    %1175 = arith.addf %1173, %1174 : vector<8x128xf32>
    %1176 = vector.broadcast %16 : f32 to vector<8x128xf32>
    %1177 = arith.mulf %1176, %1090 : vector<8x128xf32>
    %1178 = vector.broadcast %17 : f32 to vector<8x128xf32>
    %1179 = arith.mulf %1178, %1096 : vector<8x128xf32>
    %1180 = arith.addf %1177, %1179 : vector<8x128xf32>
    %1181 = vector.broadcast %18 : f32 to vector<8x128xf32>
    %1182 = arith.mulf %1181, %1102 : vector<8x128xf32>
    %1183 = arith.addf %1180, %1182 : vector<8x128xf32>
    %1184 = vector.broadcast %21 : f32 to vector<8x128xf32>
    %1185 = arith.addf %1183, %1184 : vector<8x128xf32>
    %1186 = math.absf %1185 : vector<8x128xf32>
    %cst_187 = arith.constant 9.99999971E-10 : f32
    %1187 = vector.broadcast %cst_187 : f32 to vector<8x128xf32>
    %1188 = arith.cmpf olt, %1186, %1187 : vector<8x128xf32>
    %cst_188 = arith.constant 0.000000e+00 : f32
    %1189 = vector.broadcast %cst_188 : f32 to vector<8x128xf32>
    %1190 = arith.cmpf olt, %1185, %1189 : vector<8x128xf32>
    %cst_189 = arith.constant -9.99999971E-10 : f32
    %cst_190 = arith.constant 9.99999971E-10 : f32
    %1191 = vector.broadcast %cst_189 : f32 to vector<8x128xf32>
    %1192 = vector.broadcast %cst_190 : f32 to vector<8x128xf32>
    %1193 = arith.select %1190, %1191, %1192 : vector<8x128xi1>, vector<8x128xf32>
    %1194 = arith.select %1188, %1193, %1185 : vector<8x128xi1>, vector<8x128xf32>
    %1195 = tpu.reciprocal %1194 {approx = true} : vector<8x128xf32> -> vector<8x128xf32>
    %1196 = arith.mulf %1194, %1195 : vector<8x128xf32>
    %cst_191 = arith.constant 2.000000e+00 : f32
    %1197 = vector.broadcast %cst_191 : f32 to vector<8x128xf32>
    %1198 = arith.subf %1197, %1196 : vector<8x128xf32>
    %1199 = arith.mulf %1195, %1198 : vector<8x128xf32>
    %1200 = arith.mulf %1165, %1199 : vector<8x128xf32>
    %1201 = arith.mulf %1175, %1199 : vector<8x128xf32>
    %1202 = vector.broadcast %7 : f32 to vector<8x128xf32>
    %1203 = arith.mulf %1202, %1200 : vector<8x128xf32>
    %1204 = vector.broadcast %5 : f32 to vector<8x128xf32>
    %1205 = arith.addf %1204, %1203 : vector<8x128xf32>
    %1206 = vector.broadcast %7 : f32 to vector<8x128xf32>
    %1207 = arith.mulf %1206, %1201 : vector<8x128xf32>
    %1208 = vector.broadcast %6 : f32 to vector<8x128xf32>
    %1209 = arith.addf %1208, %1207 : vector<8x128xf32>
    %1210 = vector.broadcast %0 : f32 to vector<8x128xf32>
    %1211 = arith.subf %1205, %1210 : vector<8x128xf32>
    %1212 = vector.broadcast %3 : f32 to vector<8x128xf32>
    %1213 = arith.mulf %1211, %1212 : vector<8x128xf32>
    %1214 = vector.broadcast %1 : f32 to vector<8x128xf32>
    %1215 = arith.subf %1209, %1214 : vector<8x128xf32>
    %1216 = vector.broadcast %3 : f32 to vector<8x128xf32>
    %1217 = arith.mulf %1215, %1216 : vector<8x128xf32>
    %1218 = arith.mulf %1213, %1213 : vector<8x128xf32>
    %1219 = arith.mulf %1217, %1217 : vector<8x128xf32>
    %1220 = arith.addf %1218, %1219 : vector<8x128xf32>
    %1221 = vector.broadcast %4 : f32 to vector<8x128xf32>
    %1222 = arith.mulf %1221, %1220 : vector<8x128xf32>
    %cst_192 = arith.constant 1.000000e+00 : f32
    %1223 = vector.broadcast %cst_192 : f32 to vector<8x128xf32>
    %1224 = arith.addf %1223, %1222 : vector<8x128xf32>
    %1225 = vector.broadcast %2 : f32 to vector<8x128xf32>
    %1226 = arith.mulf %1225, %1213 : vector<8x128xf32>
    %1227 = arith.mulf %1226, %1224 : vector<8x128xf32>
    %1228 = vector.broadcast %0 : f32 to vector<8x128xf32>
    %1229 = arith.addf %1228, %1227 : vector<8x128xf32>
    %1230 = vector.broadcast %2 : f32 to vector<8x128xf32>
    %1231 = arith.mulf %1230, %1217 : vector<8x128xf32>
    %1232 = arith.mulf %1231, %1224 : vector<8x128xf32>
    %1233 = vector.broadcast %1 : f32 to vector<8x128xf32>
    %1234 = arith.addf %1233, %1232 : vector<8x128xf32>
    %c5_193 = arith.constant 5 : index
    %1235 = arith.index_cast %38 : i32 to index
    %c0_194 = arith.constant 0 : index
    %1236 = vector.load %arg5[%c5_193, %1235, %c0_194] : memref<19x8x128xf32, #tpu.memory_space<vmem>>, vector<1x8x128xf32>
    %1237 = vector.shape_cast %1236 : vector<1x8x128xf32> to vector<8x128xf32>
    %1238 = vector.shape_cast %1229 : vector<8x128xf32> to vector<1x8x128xf32>
    tpu.vector_store %arg5[%c5_193, %1235, %c0_194], %1238 {strides = array<i32>} : memref<19x8x128xf32, #tpu.memory_space<vmem>>, vector<1x8x128xf32>,
    %c6_195 = arith.constant 6 : index
    %1239 = arith.index_cast %38 : i32 to index
    %c0_196 = arith.constant 0 : index
    %1240 = vector.load %arg5[%c6_195, %1239, %c0_196] : memref<19x8x128xf32, #tpu.memory_space<vmem>>, vector<1x8x128xf32>
    %1241 = vector.shape_cast %1240 : vector<1x8x128xf32> to vector<8x128xf32>
    %1242 = vector.shape_cast %1234 : vector<8x128xf32> to vector<1x8x128xf32>
    tpu.vector_store %arg5[%c6_195, %1239, %c0_196], %1242 {strides = array<i32>} : memref<19x8x128xf32, #tpu.memory_space<vmem>>, vector<1x8x128xf32>,
    %1243 = tpu.iota {dimensions = array<i32: 0>} : vector<8x128xi32>
    %1244 = tpu.iota {dimensions = array<i32: 1>} : vector<8x128xi32>
    %c128_i32 = arith.constant 128 : i32
    %1245 = arith.muli %38, %c128_i32 : i32
    %1246 = arith.addi %35, %1245 : i32
    %c128_i32_197 = arith.constant 128 : i32
    %1247 = vector.broadcast %c128_i32_197 : i32 to vector<8x128xi32>
    %1248 = arith.muli %1243, %1247 : vector<8x128xi32>
    %1249 = vector.broadcast %1246 : i32 to vector<8x128xi32>
    %1250 = arith.addi %1249, %1248 : vector<8x128xi32>
    %1251 = arith.addi %1250, %1244 : vector<8x128xi32>
    %1252 = vector.broadcast %34 : i32 to vector<8x128xi32>
    %1253 = arith.cmpi slt, %1251, %1252 : vector<8x128xi32>
    %cst_198 = arith.constant 0.000000e+00 : f32
    %1254 = vector.broadcast %cst_198 : f32 to vector<8x128xf32>
    %1255 = arith.select %1253, %590, %1254 : vector<8x128xi1>, vector<8x128xf32>
    %cst_199 = arith.constant dense<0.000000e+00> : vector<128xf32>
    %1256 = vector.multi_reduction <add>, %1255, %cst_199 [0] : vector<8x128xf32> to vector<128xf32>
    %1257 = vector.shape_cast %1256 : vector<128xf32> to vector<1x128xf32>
    %1258 = arith.addf %36, %1257 : vector<1x128xf32>
    %1259 = arith.select %1253, %812, %1254 : vector<8x128xi1>, vector<8x128xf32>
    %cst_200 = arith.constant dense<0.000000e+00> : vector<128xf32>
    %1260 = vector.multi_reduction <add>, %1259, %cst_200 [0] : vector<8x128xf32> to vector<128xf32>
    %1261 = vector.shape_cast %1260 : vector<128xf32> to vector<1x128xf32>
    %1262 = arith.addf %36, %1261 : vector<1x128xf32>
    %1263 = arith.select %1253, %155, %1254 : vector<8x128xi1>, vector<8x128xf32>
    %cst_201 = arith.constant dense<0.000000e+00> : vector<128xf32>
    %1264 = vector.multi_reduction <add>, %1263, %cst_201 [0] : vector<8x128xf32> to vector<128xf32>
    %1265 = vector.shape_cast %1264 : vector<128xf32> to vector<1x128xf32>
    %1266 = arith.addf %36, %1265 : vector<1x128xf32>
    %1267 = arith.select %1253, %156, %1254 : vector<8x128xi1>, vector<8x128xf32>
    %cst_202 = arith.constant dense<0.000000e+00> : vector<128xf32>
    %1268 = vector.multi_reduction <add>, %1267, %cst_202 [0] : vector<8x128xf32> to vector<128xf32>
    %1269 = vector.shape_cast %1268 : vector<128xf32> to vector<1x128xf32>
    %1270 = arith.addf %36, %1269 : vector<1x128xf32>
    %c1_i32 = arith.constant 1 : i32
    %c0_203 = arith.constant 0 : index
    %c0_204 = arith.constant 0 : index
    %c0_205 = arith.constant 0 : index
    %c0_206 = arith.constant 0 : index
    %1271 = vector.load %arg6[%c0_203, %c0_204, %c0_205, %c0_206] : memref<1x4x1x128xf32, #tpu.memory_space<vmem>>, vector<1x1x1x128xf32>
    %1272 = vector.shape_cast %1271 : vector<1x1x1x128xf32> to vector<1x128xf32>
    %1273 = vector.shape_cast %1258 : vector<1x128xf32> to vector<1x1x1x128xf32>
    tpu.vector_store %arg6[%c0_203, %c0_204, %c0_205, %c0_206], %1273 {strides = array<i32>} : memref<1x4x1x128xf32, #tpu.memory_space<vmem>>, vector<1x1x1x128xf32>,
    %c0_207 = arith.constant 0 : index
    %c1_208 = arith.constant 1 : index
    %c0_209 = arith.constant 0 : index
    %c0_210 = arith.constant 0 : index
    %1274 = vector.load %arg6[%c0_207, %c1_208, %c0_209, %c0_210] : memref<1x4x1x128xf32, #tpu.memory_space<vmem>>, vector<1x1x1x128xf32>
    %1275 = vector.shape_cast %1274 : vector<1x1x1x128xf32> to vector<1x128xf32>
    %1276 = vector.shape_cast %1262 : vector<1x128xf32> to vector<1x1x1x128xf32>
    tpu.vector_store %arg6[%c0_207, %c1_208, %c0_209, %c0_210], %1276 {strides = array<i32>} : memref<1x4x1x128xf32, #tpu.memory_space<vmem>>, vector<1x1x1x128xf32>,
    %c0_211 = arith.constant 0 : index
    %c2_212 = arith.constant 2 : index
    %c0_213 = arith.constant 0 : index
    %c0_214 = arith.constant 0 : index
    %1277 = vector.load %arg6[%c0_211, %c2_212, %c0_213, %c0_214] : memref<1x4x1x128xf32, #tpu.memory_space<vmem>>, vector<1x1x1x128xf32>
    %1278 = vector.shape_cast %1277 : vector<1x1x1x128xf32> to vector<1x128xf32>
    %1279 = vector.shape_cast %1266 : vector<1x128xf32> to vector<1x1x1x128xf32>
    tpu.vector_store %arg6[%c0_211, %c2_212, %c0_213, %c0_214], %1279 {strides = array<i32>} : memref<1x4x1x128xf32, #tpu.memory_space<vmem>>, vector<1x1x1x128xf32>,
    %c0_215 = arith.constant 0 : index
    %c3_216 = arith.constant 3 : index
    %c0_217 = arith.constant 0 : index
    %c0_218 = arith.constant 0 : index
    %1280 = vector.load %arg6[%c0_215, %c3_216, %c0_217, %c0_218] : memref<1x4x1x128xf32, #tpu.memory_space<vmem>>, vector<1x1x1x128xf32>
    %1281 = vector.shape_cast %1280 : vector<1x1x1x128xf32> to vector<1x128xf32>
    %1282 = vector.shape_cast %1270 : vector<1x128xf32> to vector<1x1x1x128xf32>
    tpu.vector_store %arg6[%c0_215, %c3_216, %c0_217, %c0_218], %1282 {strides = array<i32>} : memref<1x4x1x128xf32, #tpu.memory_space<vmem>>, vector<1x1x1x128xf32>,
    return
  }
  func.func @transform_0(%arg0: i32) -> i32 {
    %c0_i32 = arith.constant 0 : i32
    %c0_i32_0 = arith.constant 0 : i32
    return %c0_i32 : i32
  }
  func.func @transform_1(%arg0: i32) -> i32 {
    %c0_i32 = arith.constant 0 : i32
    %c0_i32_0 = arith.constant 0 : i32
    return %c0_i32 : i32
  }
  func.func @transform_2(%arg0: i32) -> (i32, i32, i32) {
    %c0_i32 = arith.constant 0 : i32
    %c0_i32_0 = arith.constant 0 : i32
    %c0_i32_1 = arith.constant 0 : i32
    return %c0_i32, %arg0, %c0_i32_0 : i32, i32, i32
  }
  func.func @transform_3(%arg0: i32) -> (i32, i32, i32) {
    %c0_i32 = arith.constant 0 : i32
    %c0_i32_0 = arith.constant 0 : i32
    %c0_i32_1 = arith.constant 0 : i32
    return %c0_i32, %arg0, %c0_i32_0 : i32, i32, i32
  }
  func.func @transform_4(%arg0: i32) -> (i32, i32, i32) {
    %c0_i32 = arith.constant 0 : i32
    %c0_i32_0 = arith.constant 0 : i32
    %c0_i32_1 = arith.constant 0 : i32
    return %c0_i32, %arg0, %c0_i32_0 : i32, i32, i32
  }
  func.func @transform_5(%arg0: i32) -> (i32, i32, i32, i32) {
    %c0_i32 = arith.constant 0 : i32
    %c0_i32_0 = arith.constant 0 : i32
    %c0_i32_1 = arith.constant 0 : i32
    %c0_i32_2 = arith.constant 0 : i32
    return %arg0, %c0_i32, %c0_i32_0, %c0_i32_1 : i32, i32, i32, i32
  }
}

</mosaic_0001>

<llo_original>
// kernel: arena_reprojection_forward.1
$region0: #{arena_reprojection_forward.1}
  #allocation0 [shape = 'u32[]', space=smem, size = 0x4, offset = 0x4, fixed_abs, tag = 'smem constant byte address 0x4 - core index']
  #allocation1 [shape = 'u32[72,128]{1,0:T(1,128)}', space=vmem, size = 0x9000, scoped, tag = 'internal scratch']
  #allocation2 [shape = 's32[1]{0:T(128)S(6)}', space=smem, size = 0x200, scoped, tag = 'scoped memory for arena_reprojection_forward.1']
  %s0 = inlined_call_operand.vmem [shape: f32[40], index: 0, kind: input, shape index: {}]
  %s1 = inlined_call_operand.<no memory space> [shape: s32[1], index: 1, kind: input, shape index: {}]
  %s2 = inlined_call_operand.vmem [shape: f32[4,8,128], index: 2, kind: input, shape index: {}]
  %s3 = inlined_call_operand.vmem [shape: f32[4,8,128], index: 3, kind: input, shape index: {}]
  %s4 = inlined_call_operand.vmem [shape: f32[19,8,128], index: 4, kind: output, shape index: {0}]
  %s5 = inlined_call_operand.vmem [shape: f32[1,4,1,128], index: 5, kind: output, shape index: {1}]
  %6 = xla_tuple %s4, %s5
  %s7 = sld [smem:[#allocation0]]
  $region38: #{arena_reprojection_forward.1} parent=0
    _
  %s9 = ssub.s32 1, %s7
  %s10 = scalar_select 0, %s9, %s7
  %11 = sst [smem:[#allocation2]] %s1
  $region1: #{arena_reprojection_forward.1} parent=0
    #allocation3 [shape = 'u8[512]{0}', space=smem, size = 0x200, scoped, tag = 'input window, operand 0, single buffered']
    #allocation4 [shape = 's32[1]{0}', space=sflag, size = 0x4, scoped, tag = 'scoped memory for arena_reprojection_forward.1']
    %12 = vsyncpa [#allocation4], 0
    // Predicated region
    $region2: #{arena_reprojection_forward.1} parent=1 // pred_check
      _
    $region3: #{arena_reprojection_forward.1} parent=1 // pred_check_branch
      %14 = sbr.rel (0) target = $region5
    $region4: #{arena_reprojection_forward.1} parent=1 // pred_region
      %16 = vsyncadd [#allocation4], 0
      %s18 = sshll.u32 %s0, 4
      %s19 = int_to_ptr.vmem [resolvable:$true] %s18
      %21 = dma.vmem_to_smem %s19, 16, [#allocation3], [#allocation4]
    $region5: #{arena_reprojection_forward.1} parent=1 // pred_fallthru
      _
    // Predicated region
    $region6: #{arena_reprojection_forward.1} parent=1 // pred_check
      _
    $region7: #{arena_reprojection_forward.1} parent=1 // pred_check_branch
      %23 = sbr.rel (0) target = $region9
    $region8: #{arena_reprojection_forward.1} parent=1 // pred_region
      _
    $region9: #{arena_reprojection_forward.1} parent=1 // pred_fallthru
      _
    // Predicated region
    $region10: #{arena_reprojection_forward.1} parent=1 // pred_check
      _
    $region11: #{arena_reprojection_forward.1} parent=1 // pred_check_branch
      %25 = sbr.rel (0) target = $region13
    $region12: #{arena_reprojection_forward.1} parent=1 // pred_region
      _
    $region13: #{arena_reprojection_forward.1} parent=1 // pred_fallthru
      _
    // Predicated region
    $region14: #{arena_reprojection_forward.1} parent=1 // pred_check
      _
    $region15: #{arena_reprojection_forward.1} parent=1 // pred_check_branch
      %27 = sbr.rel (0) target = $region17
    $region16: #{arena_reprojection_forward.1} parent=1 // pred_region
      _
    $region17: #{arena_reprojection_forward.1} parent=1 // pred_fallthru
      _
    // Predicated region
    $region18: #{arena_reprojection_forward.1} parent=1 // pred_check
      _
    $region19: #{arena_reprojection_forward.1} parent=1 // pred_check_branch
      %29 = sbr.rel (0) target = $region21
    $region20: #{arena_reprojection_forward.1} parent=1 // pred_region
      %31 = dma.done [#allocation4], 16
    $region21: #{arena_reprojection_forward.1} parent=1 // pred_fallthru
      _
    %32 = sfence
    %s33 = sld [smem:[#allocation3]]
    %s34 = sld [smem:[#allocation3 + $0x1]]
    %s35 = sld [smem:[#allocation3 + $0x2]]
    %s36 = sld [smem:[#allocation3 + $0x3]]
    %s37 = sld [smem:[#allocation3 + $0x4]]
    %s38 = sld [smem:[#allocation3 + $0x5]]
    %s39 = sld [smem:[#allocation3 + $0x6]]
    %s40 = sld [smem:[#allocation3 + $0x7]]
    %s41 = sld [smem:[#allocation3 + $0x8]]
    %s42 = sld [smem:[#allocation3 + $0x9]]
    %s43 = sld [smem:[#allocation3 + $0xa]]
    %s44 = sld [smem:[#allocation3 + $0xb]]
    %s45 = sld [smem:[#allocation3 + $0xc]]
    %s46 = sld [smem:[#allocation3 + $0xd]]
    %s47 = sld [smem:[#allocation3 + $0xe]]
    %s48 = sld [smem:[#allocation3 + $0xf]]
    %s49 = sld [smem:[#allocation3 + $0x10]]
    %s50 = sld [smem:[#allocation3 + $0x11]]
    %s51 = sld [smem:[#allocation3 + $0x12]]
    %s52 = sld [smem:[#allocation3 + $0x13]]
    %s53 = sld [smem:[#allocation3 + $0x14]]
    %s54 = sld [smem:[#allocation3 + $0x15]]
    %s55 = sld [smem:[#allocation3 + $0x16]]
    %s56 = sld [smem:[#allocation3 + $0x17]]
    %s57 = sld [smem:[#allocation3 + $0x18]]
    %s58 = sld [smem:[#allocation3 + $0x19]]
    %s59 = sld [smem:[#allocation3 + $0x1a]]
    %s60 = sld [smem:[#allocation3 + $0x1b]]
    %s61 = sld [smem:[#allocation3 + $0x1c]]
    %s62 = sld [smem:[#allocation3 + $0x1d]]
    %s63 = sld [smem:[#allocation3 + $0x1e]]
    %s64 = sld [smem:[#allocation3 + $0x1f]]
    %s65 = sld [smem:[#allocation3 + $0x20]]
    %s66 = sld [smem:[#allocation3 + $0x21]]
    %s67 = sld [smem:[#allocation2]]
    %s68 = smul.u32 0, 1024
    %v69 = vld [vmem:[%s2] sm:$0xff]
    %s70 = sadd.s32 0, 8
    %s71 = scalar_lea.vmem %s2, %s70
    %v72 = vld [vmem:[%s71] sm:$0xff]
    %s73 = sadd.s32 0, 16
    %s74 = scalar_lea.vmem %s2, %s73
    %v75 = vld [vmem:[%s74] sm:$0xff]
    %s76 = sadd.s32 0, 24
    %s77 = scalar_lea.vmem %s2, %s76
    %v78 = vld [vmem:[%s77] sm:$0xff]
    %v79 = vld [vmem:[%s3] sm:$0xff]
    %s80 = scalar_lea.vmem %s3, %s70
    %v81 = vld [vmem:[%s80] sm:$0xff]
    %s82 = scalar_lea.vmem %s3, %s73
    %v83 = vld [vmem:[%s82] sm:$0xff]
    %s84 = scalar_lea.vmem %s3, %s76
    %v85 = vld [vmem:[%s84] sm:$0xff]
    %v86 = vstv %s33
    %v87 = vsub.f32 %v69, %v86
    %v88 = vstv %s36
    %v89 = vmul.f32 %v87, %v88
    %v90 = vstv %s34
    %v91 = vsub.f32 %v72, %v90
    %v92 = vmul.f32 %v91, %v88
    %v93 = vmul.f32 %v89, %v89
    %v94 = vmul.f32 %v92, %v92
    %v95 = vadd.f32 %v93, %v94
    %v96 = vstv %s37
    %v97 = vmul.f32 %v96, %v95
    %v98 = vadd.f32 %v97, 1.0
    %v99 = vrcp.pop %v98
    %v100 = vmul.f32 %v98, %v99
    %v101 = vsub.f32 2.0, %v100
    %v102 = vmul.f32 %v99, %v101
    %v103 = vmul.f32 %v89, %v102
    %v104 = vmul.f32 %v92, %v102
    %v105 = vmul.f32 %v97, %v97
    %v106 = vstv %s38
    %v107 = vsub.f32 %v75, %v106
    %v108 = vstv %s41
    %v109 = vmul.f32 %v107, %v108
    %v110 = vstv %s39
    %v111 = vsub.f32 %v78, %v110
    %v112 = vmul.f32 %v111, %v108
    %v113 = vmul.f32 %v109, %v109
    %v114 = vmul.f32 %v112, %v112
    %v115 = vadd.f32 %v113, %v114
    %v116 = vstv %s42
    %v117 = vmul.f32 %v116, %v115
    %v118 = vadd.f32 %v117, 1.0
    %v119 = vrcp.pop %v118
    %v120 = vmul.f32 %v118, %v119
    %v121 = vsub.f32 2.0, %v120
    %v122 = vmul.f32 %v119, %v121
    %v123 = vmul.f32 %v109, %v122
    %v124 = vmul.f32 %v112, %v122
    %v125 = vmul.f32 %v117, %v117
    %v126 = vsub.f32 %v79, %v86
    %v127 = vmul.f32 %v126, %v88
    %v128 = vsub.f32 %v81, %v90
    %v129 = vmul.f32 %v128, %v88
    %v130 = vmul.f32 %v127, %v127
    %v131 = vmul.f32 %v129, %v129
    %v132 = vadd.f32 %v130, %v131
    %v133 = vmul.f32 %v96, %v132
    %v134 = vadd.f32 %v133, 1.0
    %v135 = vrcp.pop %v134
    %v136 = vmul.f32 %v134, %v135
    %v137 = vsub.f32 2.0, %v136
    %v138 = vmul.f32 %v135, %v137
    %v139 = vmul.f32 %v127, %v138
    %v140 = vmul.f32 %v129, %v138
    %v141 = vmul.f32 %v133, %v133
    %v142 = vsub.f32 %v83, %v106
    %v143 = vmul.f32 %v142, %v108
    %v144 = vsub.f32 %v85, %v110
    %v145 = vmul.f32 %v144, %v108
    %v146 = vmul.f32 %v143, %v143
    %v147 = vmul.f32 %v145, %v145
    %v148 = vadd.f32 %v146, %v147
    %v149 = vmul.f32 %v116, %v148
    %v150 = vadd.f32 %v149, 1.0
    %v151 = vrcp.pop %v150
    %v152 = vmul.f32 %v150, %v151
    %v153 = vsub.f32 2.0, %v152
    %v154 = vmul.f32 %v151, %v153
    %v155 = vmul.f32 %v143, %v154
    %v156 = vmul.f32 %v145, %v154
    %v157 = vmul.f32 %v149, %v149
    %v158 = vadd.f32 %v105, %v141
    %v159 = vadd.f32 %v125, %v157
    %v160 = vmul.f32 %v139, %v139
    %v161 = vmul.f32 %v140, %v140
    %v162 = vadd.f32 %v160, %v161
    %v163 = vadd.f32 %v162, 1.0
    %v164 = vrsqrt.pop %v163
    %v165 = vmul.f32 %v164, %v163
    %v166 = vmul.f32 %v165, %v164
    %v167 = vmul.f32 0.5, %v166
    %v168 = vsub.f32 1.5, %v167
    %v169 = vmul.f32 %v164, %v168
    %vm170 = vweird.f32 %v163
    %vm171 = vweird.f32 %v164
    %vm172 = vmor %vm170, %vm171
    %v173 = vsel %vm172, %v164, %v169
    %v174 = vmul.f32 %v139, %v173
    %v175 = vmul.f32 %v140, %v173
    %v176 = vmul.f32 %v155, %v155
    %v177 = vmul.f32 %v156, %v156
    %v178 = vadd.f32 %v176, %v177
    %v179 = vadd.f32 %v178, 1.0
    %v180 = vrsqrt.pop %v179
    %v181 = vmul.f32 %v180, %v179
    %v182 = vmul.f32 %v181, %v180
    %v183 = vmul.f32 0.5, %v182
    %v184 = vsub.f32 1.5, %v183
    %v185 = vmul.f32 %v180, %v184
    %vm186 = vweird.f32 %v179
    %vm187 = vweird.f32 %v180
    %vm188 = vmor %vm186, %vm187
    %v189 = vsel %vm188, %v180, %v185
    %v190 = vmul.f32 %v155, %v189
    %v191 = vmul.f32 %v156, %v189
    %v192 = vstv %s43
    %v193 = vmul.f32 %v192, %v190
    %v194 = vstv %s46
    %v195 = vmul.f32 %v194, %v191
    %v196 = vadd.f32 %v193, %v195
    %v197 = vstv %s49
    %v198 = vmul.f32 %v197, %v189
    %v199 = vadd.f32 %v196, %v198
    %v200 = vstv %s44
    %v201 = vmul.f32 %v200, %v190
    %v202 = vstv %s47
    %v203 = vmul.f32 %v202, %v191
    %v204 = vadd.f32 %v201, %v203
    %v205 = vstv %s50
    %v206 = vmul.f32 %v205, %v189
    %v207 = vadd.f32 %v204, %v206
    %v208 = vstv %s45
    %v209 = vmul.f32 %v208, %v190
    %v210 = vstv %s48
    %v211 = vmul.f32 %v210, %v191
    %v212 = vadd.f32 %v209, %v211
    %v213 = vstv %s51
    %v214 = vmul.f32 %v213, %v189
    %v215 = vadd.f32 %v212, %v214
    %s216 = ssub.f32 0.0, %s55
    %s217 = ssub.f32 0.0, %s56
    %s218 = ssub.f32 0.0, %s57
    %v219 = vmul.f32 %v174, %v199
    %v220 = vmul.f32 %v175, %v207
    %v221 = vadd.f32 %v219, %v220
    %v222 = vmul.f32 %v173, %v215
    %v223 = vadd.f32 %v221, %v222
    %v224 = vstv %s216
    %v225 = vmul.f32 %v174, %v224
    %v226 = vstv %s217
    %v227 = vmul.f32 %v175, %v226
    %v228 = vadd.f32 %v225, %v227
    %v229 = vstv %s218
    %v230 = vmul.f32 %v173, %v229
    %v231 = vadd.f32 %v228, %v230
    %v232 = vmul.f32 %v199, %v224
    %v233 = vmul.f32 %v207, %v226
    %v234 = vadd.f32 %v232, %v233
    %v235 = vmul.f32 %v215, %v229
    %v236 = vadd.f32 %v234, %v235
    %v237 = vmul.f32 %v223, %v223
    %v238 = vsub.f32 1.0, %v237
    %vm239 = vcmp.lt.f32.partialorder %v238, 1e-09
    %v240 = vsel %vm239, 1e-09, %v238
    %v241 = vrcp.pop %v240
    %v242 = vmul.f32 %v240, %v241
    %v243 = vsub.f32 2.0, %v242
    %v244 = vmul.f32 %v241, %v243
    %v245 = vmul.f32 %v223, %v236
    %v246 = vsub.f32 %v245, %v231
    %v247 = vmul.f32 %v246, %v244
    %v248 = vmul.f32 %v223, %v231
    %v249 = vsub.f32 %v236, %v248
    %v250 = vmul.f32 %v249, %v244
    %v251 = vmul.f32 %v247, %v174
    %v252 = vadd.f32 %v251, 0.0
    %v253 = vmul.f32 %v247, %v175
    %v254 = vadd.f32 %v253, 0.0
    %v255 = vmul.f32 %v247, %v173
    %v256 = vadd.f32 %v255, 0.0
    %v257 = vmul.f32 %v250, %v199
    %v258 = vstv %s55
    %v259 = vadd.f32 %v258, %v257
    %v260 = vmul.f32 %v250, %v207
    %v261 = vstv %s56
    %v262 = vadd.f32 %v261, %v260
    %v263 = vmul.f32 %v250, %v215
    %v264 = vstv %s57
    %v265 = vadd.f32 %v264, %v263
    %v266 = vadd.f32 %v252, %v259
    %v267 = vmul.f32 %v266, 0.5
    %v268 = vadd.f32 %v254, %v262
    %v269 = vmul.f32 %v268, 0.5
    %v270 = vadd.f32 %v256, %v265
    %v271 = vmul.f32 %v270, 0.5
    %v272 = vsub.f32 %v252, %v259
    %v273 = vsub.f32 %v254, %v262
    %v274 = vsub.f32 %v256, %v265
    %v275 = vmul.f32 %v272, %v272
    %v276 = vmul.f32 %v273, %v273
    %v277 = vadd.f32 %v275, %v276
    %v278 = vmul.f32 %v274, %v274
    %v279 = vadd.f32 %v277, %v278
    %v280 = vadd.f32 %v279, 1e-08
    %v281 = vrsqrt.pop %v280
    %v282 = vmul.f32 %v281, %v280
    %v283 = vmul.f32 %v282, %v281
    %v284 = vmul.f32 0.5, %v283
    %v285 = vsub.f32 1.5, %v284
    %v286 = vmul.f32 %v281, %v285
    %v287 = vmul.f32 %v280, %v286
    %vm288 = vcmp.eq.f32.partialorder %v280, inf
    %v289 = vsel %vm288, %v280, %v287
    %vm290 = vcmp.eq.f32.partialorder %v280, 0.0
    %v291 = vand.u32 %v280, 2147483648
    %v292 = vsel %vm290, %v291, %v289
    %s293 = sadd.s32 0, 136
    %s294 = scalar_lea.vmem %s4, %s293
    %295 = vst [vmem:[%s294] sm:$0xff] %v292
    %v296 = vand.u32 2147483647, %v271
    %vm297 = vcmp.lt.f32.partialorder %v296, 1e-09
    %vm298 = vcmp.lt.f32.partialorder %v271, 0.0
    %v299 = vsel %vm298, -1e-09, 1e-09
    %v300 = vsel %vm297, %v299, %v271
    %v301 = vrcp.pop %v300
    %v302 = vmul.f32 %v300, %v301
    %v303 = vsub.f32 2.0, %v302
    %v304 = vmul.f32 %v301, %v303
    %v305 = vmul.f32 %v267, %v304
    %v306 = vmul.f32 %v269, %v304
    %v307 = vmul.f32 %v305, %v305
    %v308 = vmul.f32 %v306, %v306
    %v309 = vadd.f32 %v307, %v308
    %v310 = vmul.f32 %v96, %v309
    %v311 = vadd.f32 %v310, 1.0
    %v312 = vstv %s35
    %v313 = vmul.f32 %v312, %v305
    %v314 = vmul.f32 %v313, %v311
    %v315 = vadd.f32 %v86, %v314
    %v316 = vmul.f32 %v312, %v306
    %v317 = vmul.f32 %v316, %v311
    %v318 = vadd.f32 %v90, %v317
    %s319 = sadd.s32 0, 88
    %s320 = scalar_lea.vmem %s4, %s319
    %321 = vst [vmem:[%s320] sm:$0xff] %v315
    %s322 = sadd.s32 0, 96
    %s323 = scalar_lea.vmem %s4, %s322
    %324 = vst [vmem:[%s323] sm:$0xff] %v318
    %v325 = vmul.f32 %v192, %v267
    %v326 = vmul.f32 %v200, %v269
    %v327 = vadd.f32 %v325, %v326
    %v328 = vmul.f32 %v208, %v271
    %v329 = vadd.f32 %v327, %v328
    %v330 = vstv %s52
    %v331 = vadd.f32 %v329, %v330
    %v332 = vmul.f32 %v194, %v267
    %v333 = vmul.f32 %v202, %v269
    %v334 = vadd.f32 %v332, %v333
    %v335 = vmul.f32 %v210, %v271
    %v336 = vadd.f32 %v334, %v335
    %v337 = vstv %s53
    %v338 = vadd.f32 %v336, %v337
    %v339 = vmul.f32 %v197, %v267
    %v340 = vmul.f32 %v205, %v269
    %v341 = vadd.f32 %v339, %v340
    %v342 = vmul.f32 %v213, %v271
    %v343 = vadd.f32 %v341, %v342
    %v344 = vstv %s54
    %v345 = vadd.f32 %v343, %v344
    %v346 = vand.u32 2147483647, %v345
    %vm347 = vcmp.lt.f32.partialorder %v346, 1e-09
    %vm348 = vcmp.lt.f32.partialorder %v345, 0.0
    %v349 = vsel %vm348, -1e-09, 1e-09
    %v350 = vsel %vm347, %v349, %v345
    %v351 = vrcp.pop %v350
    %v352 = vmul.f32 %v350, %v351
    %v353 = vsub.f32 2.0, %v352
    %v354 = vmul.f32 %v351, %v353
    %v355 = vmul.f32 %v331, %v354
    %v356 = vmul.f32 %v338, %v354
    %v357 = vmul.f32 %v355, %v355
    %v358 = vmul.f32 %v356, %v356
    %v359 = vadd.f32 %v357, %v358
    %v360 = vmul.f32 %v116, %v359
    %v361 = vadd.f32 %v360, 1.0
    %v362 = vstv %s40
    %v363 = vmul.f32 %v362, %v355
    %v364 = vmul.f32 %v363, %v361
    %v365 = vadd.f32 %v106, %v364
    %v366 = vmul.f32 %v362, %v356
    %v367 = vmul.f32 %v366, %v361
    %v368 = vadd.f32 %v110, %v367
    %s369 = sadd.s32 0, 104
    %s370 = scalar_lea.vmem %s4, %s369
    %371 = vst [vmem:[%s370] sm:$0xff] %v365
    %s372 = sadd.s32 0, 112
    %s373 = scalar_lea.vmem %s4, %s372
    %374 = vst [vmem:[%s373] sm:$0xff] %v368
    %v375 = vmul.f32 %v103, %v103
    %v376 = vmul.f32 %v104, %v104
    %v377 = vadd.f32 %v375, %v376
    %v378 = vadd.f32 %v377, 1.0
    %v379 = vrsqrt.pop %v378
    %v380 = vmul.f32 %v379, %v378
    %v381 = vmul.f32 %v380, %v379
    %v382 = vmul.f32 0.5, %v381
    %v383 = vsub.f32 1.5, %v382
    %v384 = vmul.f32 %v379, %v383
    %vm385 = vweird.f32 %v378
    %vm386 = vweird.f32 %v379
    %vm387 = vmor %vm385, %vm386
    %v388 = vsel %vm387, %v379, %v384
    %v389 = vmul.f32 %v103, %v388
    %v390 = vmul.f32 %v104, %v388
    %v391 = vstv %s58
    %v392 = vmul.f32 %v391, %v389
    %v393 = vstv %s59
    %v394 = vmul.f32 %v393, %v390
    %v395 = vadd.f32 %v392, %v394
    %v396 = vstv %s60
    %v397 = vmul.f32 %v396, %v388
    %v398 = vadd.f32 %v395, %v397
    %vm399 = vcmp.gt.f32.partialorder %v398, 0.0
    %v400 = vsel %vm399, -1.0, 1.0
    %v401 = vmul.f32 %v391, %v400
    %v402 = vmul.f32 %v393, %v400
    %v403 = vmul.f32 %v396, %v400
    %s404 = smul.f32 %s64, %s58
    %s405 = ssub.f32 %s61, %s404
    %s406 = smul.f32 %s64, %s59
    %s407 = ssub.f32 %s62, %s406
    %s408 = smul.f32 %s64, %s60
    %s409 = ssub.f32 %s63, %s408
    %s410 = sadd.f32 %s61, %s404
    %s411 = sadd.f32 %s62, %s406
    %s412 = sadd.f32 %s63, %s408
    %v413 = vand.u32 2147483647, %v398
    %vm414 = vcmp.lt.f32.partialorder %v413, 1e-09
    %vm415 = vcmp.lt.f32.partialorder %v398, 0.0
    %v416 = vsel %vm415, -1e-09, 1e-09
    %v417 = vsel %vm414, %v416, %v398
    %s418 = smul.f32 %s58, %s405
    %s419 = smul.f32 %s59, %s407
    %s420 = sadd.f32 %s418, %s419
    %s421 = smul.f32 %s60, %s409
    %s422 = sadd.f32 %s420, %s421
    %v423 = vrcp.pop %v417
    %v424 = vmul.f32 %v417, %v423
    %v425 = vsub.f32 2.0, %v424
    %v426 = vmul.f32 %v423, %v425
    %v427 = vstv %s422
    %v428 = vmul.f32 %v427, %v426
    %v429 = vmul.f32 %v428, %v389
    %v430 = vadd.f32 %v429, 0.0
    %v431 = vmul.f32 %v428, %v390
    %v432 = vadd.f32 %v431, 0.0
    %v433 = vmul.f32 %v428, %v388
    %v434 = vadd.f32 %v433, 0.0
    %v435 = vmul.f32 %v401, %v389
    %v436 = vmul.f32 %v402, %v390
    %v437 = vadd.f32 %v435, %v436
    %v438 = vmul.f32 %v403, %v388
    %v439 = vadd.f32 %v437, %v438
    %v440 = vsub.f32 0.0, %v439
    %s441 = smul.f32 %s66, %s66
    %v442 = vmul.f32 %v440, %v440
    %v443 = vsub.f32 1.0, %v442
    %v444 = vstv %s441
    %v445 = vmul.f32 %v444, %v443
    %v446 = vsub.f32 1.0, %v445
    %v447 = vmax.f32 %v446, 0.0
    %v448 = vstv %s66
    %v449 = vmul.f32 %v448, %v440
    %v450 = vrsqrt.pop %v447
    %v451 = vmul.f32 %v450, %v447
    %v452 = vmul.f32 %v451, %v450
    %v453 = vmul.f32 0.5, %v452
    %v454 = vsub.f32 1.5, %v453
    %v455 = vmul.f32 %v450, %v454
    %v456 = vmul.f32 %v447, %v455
    %vm457 = vcmp.eq.f32.partialorder %v447, inf
    %v458 = vsel %vm457, %v447, %v456
    %vm459 = vcmp.eq.f32.partialorder %v447, 0.0
    %v460 = vand.u32 %v447, 2147483648
    %v461 = vsel %vm459, %v460, %v458
    %v462 = vsub.f32 %v449, %v461
    %v463 = vmul.f32 %v448, %v389
    %v464 = vmul.f32 %v462, %v401
    %v465 = vadd.f32 %v463, %v464
    %v466 = vmul.f32 %v448, %v390
    %v467 = vmul.f32 %v462, %v402
    %v468 = vadd.f32 %v466, %v467
    %v469 = vmul.f32 %v448, %v388
    %v470 = vmul.f32 %v462, %v403
    %v471 = vadd.f32 %v469, %v470
    %v472 = vmul.f32 %v391, %v465
    %v473 = vmul.f32 %v393, %v468
    %v474 = vadd.f32 %v472, %v473
    %v475 = vmul.f32 %v396, %v471
    %v476 = vadd.f32 %v474, %v475
    %v477 = vand.u32 2147483647, %v476
    %vm478 = vcmp.lt.f32.partialorder %v477, 1e-09
    %vm479 = vcmp.lt.f32.partialorder %v476, 0.0
    %v480 = vsel %vm479, -1e-09, 1e-09
    %v481 = vsel %vm478, %v480, %v476
    %v482 = vstv %s410
    %v483 = vsub.f32 %v482, %v430
    %v484 = vmul.f32 %v391, %v483
    %v485 = vstv %s411
    %v486 = vsub.f32 %v485, %v432
    %v487 = vmul.f32 %v393, %v486
    %v488 = vadd.f32 %v484, %v487
    %v489 = vstv %s412
    %v490 = vsub.f32 %v489, %v434
    %v491 = vmul.f32 %v396, %v490
    %v492 = vadd.f32 %v488, %v491
    %v493 = vrcp.pop %v481
    %v494 = vmul.f32 %v481, %v493
    %v495 = vsub.f32 2.0, %v494
    %v496 = vmul.f32 %v493, %v495
    %v497 = vmul.f32 %v492, %v496
    %v498 = vmul.f32 %v497, %v465
    %v499 = vadd.f32 %v430, %v498
    %v500 = vmul.f32 %v497, %v468
    %v501 = vadd.f32 %v432, %v500
    %v502 = vmul.f32 %v497, %v471
    %v503 = vadd.f32 %v434, %v502
    %v504 = vmul.f32 %v401, %v465
    %v505 = vmul.f32 %v402, %v468
    %v506 = vadd.f32 %v504, %v505
    %v507 = vmul.f32 %v403, %v471
    %v508 = vadd.f32 %v506, %v507
    %v509 = vsub.f32 0.0, %v508
    %s510 = smul.f32 %s65, %s65
    %v511 = vmul.f32 %v509, %v509
    %v512 = vsub.f32 1.0, %v511
    %v513 = vstv %s510
    %v514 = vmul.f32 %v513, %v512
    %v515 = vsub.f32 1.0, %v514
    %v516 = vmax.f32 %v515, 0.0
    %v517 = vstv %s65
    %v518 = vmul.f32 %v517, %v509
    %v519 = vrsqrt.pop %v516
    %v520 = vmul.f32 %v519, %v516
    %v521 = vmul.f32 %v520, %v519
    %v522 = vmul.f32 0.5, %v521
    %v523 = vsub.f32 1.5, %v522
    %v524 = vmul.f32 %v519, %v523
    %v525 = vmul.f32 %v516, %v524
    %vm526 = vcmp.eq.f32.partialorder %v516, inf
    %v527 = vsel %vm526, %v516, %v525
    %vm528 = vcmp.eq.f32.partialorder %v516, 0.0
    %v529 = vand.u32 %v516, 2147483648
    %v530 = vsel %vm528, %v529, %v527
    %v531 = vsub.f32 %v518, %v530
    %v532 = vmul.f32 %v517, %v465
    %v533 = vmul.f32 %v531, %v401
    %v534 = vadd.f32 %v532, %v533
    %v535 = vmul.f32 %v517, %v468
    %v536 = vmul.f32 %v531, %v402
    %v537 = vadd.f32 %v535, %v536
    %v538 = vmul.f32 %v517, %v471
    %v539 = vmul.f32 %v531, %v403
    %v540 = vadd.f32 %v538, %v539
    %v541 = vsub.f32 0.0, %v428
    %v542 = vmax.f32 %v541, 0.0
    %v543 = vsub.f32 0.0, %v497
    %v544 = vmax.f32 %v543, 0.0
    %v545 = vadd.f32 %v542, %v544
    %v546 = vmul.f32 %v123, %v123
    %v547 = vmul.f32 %v124, %v124
    %v548 = vadd.f32 %v546, %v547
    %v549 = vadd.f32 %v548, 1.0
    %v550 = vrsqrt.pop %v549
    %v551 = vmul.f32 %v550, %v549
    %v552 = vmul.f32 %v551, %v550
    %v553 = vmul.f32 0.5, %v552
    %v554 = vsub.f32 1.5, %v553
    %v555 = vmul.f32 %v550, %v554
    %vm556 = vweird.f32 %v549
    %vm557 = vweird.f32 %v550
    %vm558 = vmor %vm556, %vm557
    %v559 = vsel %vm558, %v550, %v555
    %v560 = vmul.f32 %v123, %v559
    %v561 = vmul.f32 %v124, %v559
    %v562 = vmul.f32 %v192, %v560
    %v563 = vmul.f32 %v194, %v561
    %v564 = vadd.f32 %v562, %v563
    %v565 = vmul.f32 %v197, %v559
    %v566 = vadd.f32 %v564, %v565
    %v567 = vmul.f32 %v200, %v560
    %v568 = vmul.f32 %v202, %v561
    %v569 = vadd.f32 %v567, %v568
    %v570 = vmul.f32 %v205, %v559
    %v571 = vadd.f32 %v569, %v570
    %v572 = vmul.f32 %v208, %v560
    %v573 = vmul.f32 %v210, %v561
    %v574 = vadd.f32 %v572, %v573
    %v575 = vmul.f32 %v213, %v559
    %v576 = vadd.f32 %v574, %v575
    %v577 = vmul.f32 %v391, %v566
    %v578 = vmul.f32 %v393, %v571
    %v579 = vadd.f32 %v577, %v578
    %v580 = vmul.f32 %v396, %v576
    %v581 = vadd.f32 %v579, %v580
    %vm582 = vcmp.gt.f32.partialorder %v581, 0.0
    %v583 = vsel %vm582, -1.0, 1.0
    %v584 = vmul.f32 %v391, %v583
    %v585 = vmul.f32 %v393, %v583
    %v586 = vmul.f32 %v396, %v583
    %v587 = vand.u32 2147483647, %v581
    %vm588 = vcmp.lt.f32.partialorder %v587, 1e-09
    %vm589 = vcmp.lt.f32.partialorder %v581, 0.0
    %v590 = vsel %vm589, -1e-09, 1e-09
    %v591 = vsel %vm588, %v590, %v581
    %s592 = ssub.f32 %s405, %s55
    %s593 = smul.f32 %s58, %s592
    %s594 = ssub.f32 %s407, %s56
    %s595 = smul.f32 %s59, %s594
    %s596 = sadd.f32 %s593, %s595
    %s597 = ssub.f32 %s409, %s57
    %s598 = smul.f32 %s60, %s597
    %s599 = sadd.f32 %s596, %s598
    %v600 = vrcp.pop %v591
    %v601 = vmul.f32 %v591, %v600
    %v602 = vsub.f32 2.0, %v601
    %v603 = vmul.f32 %v600, %v602
    %v604 = vstv %s599
    %v605 = vmul.f32 %v604, %v603
    %v606 = vmul.f32 %v605, %v566
    %v607 = vadd.f32 %v258, %v606
    %v608 = vmul.f32 %v605, %v571
    %v609 = vadd.f32 %v261, %v608
    %v610 = vmul.f32 %v605, %v576
    %v611 = vadd.f32 %v264, %v610
    %v612 = vmul.f32 %v584, %v566
    %v613 = vmul.f32 %v585, %v571
    %v614 = vadd.f32 %v612, %v613
    %v615 = vmul.f32 %v586, %v576
    %v616 = vadd.f32 %v614, %v615
    %v617 = vsub.f32 0.0, %v616
    %v618 = vmul.f32 %v617, %v617
    %v619 = vsub.f32 1.0, %v618
    %v620 = vmul.f32 %v444, %v619
    %v621 = vsub.f32 1.0, %v620
    %v622 = vmax.f32 %v621, 0.0
    %v623 = vmul.f32 %v448, %v617
    %v624 = vrsqrt.pop %v622
    %v625 = vmul.f32 %v624, %v622
    %v626 = vmul.f32 %v625, %v624
    %v627 = vmul.f32 0.5, %v626
    %v628 = vsub.f32 1.5, %v627
    %v629 = vmul.f32 %v624, %v628
    %v630 = vmul.f32 %v622, %v629
    %vm631 = vcmp.eq.f32.partialorder %v622, inf
    %v632 = vsel %vm631, %v622, %v630
    %vm633 = vcmp.eq.f32.partialorder %v622, 0.0
    %v634 = vand.u32 %v622, 2147483648
    %v635 = vsel %vm633, %v634, %v632
    %v636 = vsub.f32 %v623, %v635
    %v637 = vmul.f32 %v448, %v566
    %v638 = vmul.f32 %v636, %v584
    %v639 = vadd.f32 %v637, %v638
    %v640 = vmul.f32 %v448, %v571
    %v641 = vmul.f32 %v636, %v585
    %v642 = vadd.f32 %v640, %v641
    %v643 = vmul.f32 %v448, %v576
    %v644 = vmul.f32 %v636, %v586
    %v645 = vadd.f32 %v643, %v644
    %v646 = vmul.f32 %v391, %v639
    %v647 = vmul.f32 %v393, %v642
    %v648 = vadd.f32 %v646, %v647
    %v649 = vmul.f32 %v396, %v645
    %v650 = vadd.f32 %v648, %v649
    %v651 = vand.u32 2147483647, %v650
    %vm652 = vcmp.lt.f32.partialorder %v651, 1e-09
    %vm653 = vcmp.lt.f32.partialorder %v650, 0.0
    %v654 = vsel %vm653, -1e-09, 1e-09
    %v655 = vsel %vm652, %v654, %v650
    %v656 = vsub.f32 %v482, %v607
    %v657 = vmul.f32 %v391, %v656
    %v658 = vsub.f32 %v485, %v609
    %v659 = vmul.f32 %v393, %v658
    %v660 = vadd.f32 %v657, %v659
    %v661 = vsub.f32 %v489, %v611
    %v662 = vmul.f32 %v396, %v661
    %v663 = vadd.f32 %v660, %v662
    %v664 = vrcp.pop %v655
    %v665 = vmul.f32 %v655, %v664
    %v666 = vsub.f32 2.0, %v665
    %v667 = vmul.f32 %v664, %v666
    %v668 = vmul.f32 %v663, %v667
    %v669 = vmul.f32 %v668, %v639
    %v670 = vadd.f32 %v607, %v669
    %v671 = vmul.f32 %v668, %v642
    %v672 = vadd.f32 %v609, %v671
    %v673 = vmul.f32 %v668, %v645
    %v674 = vadd.f32 %v611, %v673
    %v675 = vmul.f32 %v584, %v639
    %v676 = vmul.f32 %v585, %v642
    %v677 = vadd.f32 %v675, %v676
    %v678 = vmul.f32 %v586, %v645
    %v679 = vadd.f32 %v677, %v678
    %v680 = vsub.f32 0.0, %v679
    %v681 = vmul.f32 %v680, %v680
    %v682 = vsub.f32 1.0, %v681
    %v683 = vmul.f32 %v513, %v682
    %v684 = vsub.f32 1.0, %v683
    %v685 = vmax.f32 %v684, 0.0
    %v686 = vmul.f32 %v517, %v680
    %v687 = vrsqrt.pop %v685
    %v688 = vmul.f32 %v687, %v685
    %v689 = vmul.f32 %v688, %v687
    %v690 = vmul.f32 0.5, %v689
    %v691 = vsub.f32 1.5, %v690
    %v692 = vmul.f32 %v687, %v691
    %v693 = vmul.f32 %v685, %v692
    %vm694 = vcmp.eq.f32.partialorder %v685, inf
    %v695 = vsel %vm694, %v685, %v693
    %vm696 = vcmp.eq.f32.partialorder %v685, 0.0
    %v697 = vand.u32 %v685, 2147483648
    %v698 = vsel %vm696, %v697, %v695
    %v699 = vsub.f32 %v686, %v698
    %v700 = vmul.f32 %v517, %v639
    %v701 = vmul.f32 %v699, %v584
    %v702 = vadd.f32 %v700, %v701
    %v703 = vmul.f32 %v517, %v642
    %v704 = vmul.f32 %v699, %v585
    %v705 = vadd.f32 %v703, %v704
    %v706 = vmul.f32 %v517, %v645
    %v707 = vmul.f32 %v699, %v586
    %v708 = vadd.f32 %v706, %v707
    %v709 = vsub.f32 0.0, %v605
    %v710 = vmax.f32 %v709, 0.0
    %v711 = vsub.f32 0.0, %v668
    %v712 = vmax.f32 %v711, 0.0
    %v713 = vadd.f32 %v710, %v712
    %v714 = vsub.f32 %v499, %v670
    %v715 = vsub.f32 %v501, %v672
    %v716 = vsub.f32 %v503, %v674
    %v717 = vmul.f32 %v534, %v702
    %v718 = vmul.f32 %v537, %v705
    %v719 = vadd.f32 %v717, %v718
    %v720 = vmul.f32 %v540, %v708
    %v721 = vadd.f32 %v719, %v720
    %v722 = vmul.f32 %v534, %v714
    %v723 = vmul.f32 %v537, %v715
    %v724 = vadd.f32 %v722, %v723
    %v725 = vmul.f32 %v540, %v716
    %v726 = vadd.f32 %v724, %v725
    %v727 = vmul.f32 %v702, %v714
    %v728 = vmul.f32 %v705, %v715
    %v729 = vadd.f32 %v727, %v728
    %v730 = vmul.f32 %v708, %v716
    %v731 = vadd.f32 %v729, %v730
    %v732 = vmul.f32 %v721, %v721
    %v733 = vsub.f32 1.0, %v732
    %vm734 = vcmp.lt.f32.partialorder %v733, 1e-09
    %v735 = vsel %vm734, 1e-09, %v733
    %v736 = vrcp.pop %v735
    %v737 = vmul.f32 %v735, %v736
    %v738 = vsub.f32 2.0, %v737
    %v739 = vmul.f32 %v736, %v738
    %v740 = vmul.f32 %v721, %v731
    %v741 = vsub.f32 %v740, %v726
    %v742 = vmul.f32 %v741, %v739
    %v743 = vmul.f32 %v721, %v726
    %v744 = vsub.f32 %v731, %v743
    %v745 = vmul.f32 %v744, %v739
    %v746 = vmul.f32 %v742, %v534
    %v747 = vadd.f32 %v499, %v746
    %v748 = vmul.f32 %v742, %v537
    %v749 = vadd.f32 %v501, %v748
    %v750 = vmul.f32 %v742, %v540
    %v751 = vadd.f32 %v503, %v750
    %v752 = vmul.f32 %v745, %v702
    %v753 = vadd.f32 %v670, %v752
    %v754 = vmul.f32 %v745, %v705
    %v755 = vadd.f32 %v672, %v754
    %v756 = vmul.f32 %v745, %v708
    %v757 = vadd.f32 %v674, %v756
    %v758 = vadd.f32 %v747, %v753
    %v759 = vmul.f32 %v758, 0.5
    %v760 = vadd.f32 %v749, %v755
    %v761 = vmul.f32 %v760, 0.5
    %v762 = vadd.f32 %v751, %v757
    %v763 = vmul.f32 %v762, 0.5
    %v764 = vsub.f32 %v747, %v753
    %v765 = vsub.f32 %v749, %v755
    %v766 = vsub.f32 %v751, %v757
    %v767 = vmul.f32 %v764, %v764
    %v768 = vmul.f32 %v765, %v765
    %v769 = vadd.f32 %v767, %v768
    %v770 = vmul.f32 %v766, %v766
    %v771 = vadd.f32 %v769, %v770
    %v772 = vadd.f32 %v771, 1e-08
    %v773 = vrsqrt.pop %v772
    %v774 = vmul.f32 %v773, %v772
    %v775 = vmul.f32 %v774, %v773
    %v776 = vmul.f32 0.5, %v775
    %v777 = vsub.f32 1.5, %v776
    %v778 = vmul.f32 %v773, %v777
    %v779 = vmul.f32 %v772, %v778
    %vm780 = vcmp.eq.f32.partialorder %v772, inf
    %v781 = vsel %vm780, %v772, %v779
    %vm782 = vcmp.eq.f32.partialorder %v772, 0.0
    %v783 = vand.u32 %v772, 2147483648
    %v784 = vsel %vm782, %v783, %v781
    %s785 = sadd.s32 0, 128
    %s786 = scalar_lea.vmem %s4, %s785
    %787 = vst [vmem:[%s786] sm:$0xff] %v784
    %v788 = vand.u32 2147483647, %v763
    %vm789 = vcmp.lt.f32.partialorder %v788, 1e-09
    %vm790 = vcmp.lt.f32.partialorder %v763, 0.0
    %v791 = vsel %vm790, -1e-09, 1e-09
    %v792 = vsel %vm789, %v791, %v763
    %v793 = vrcp.pop %v792
    %v794 = vmul.f32 %v792, %v793
    %v795 = vsub.f32 2.0, %v794
    %v796 = vmul.f32 %v793, %v795
    %v797 = vmul.f32 %v759, %v796
    %v798 = vmul.f32 %v761, %v796
    %v799 = vmul.f32 %v797, %v797
    %v800 = vmul.f32 %v798, %v798
    %v801 = vadd.f32 %v799, %v800
    %v802 = vmul.f32 %v96, %v801
    %v803 = vadd.f32 %v802, 1.0
    %v804 = vmul.f32 %v312, %v797
    %v805 = vmul.f32 %v804, %v803
    %v806 = vadd.f32 %v86, %v805
    %v807 = vmul.f32 %v312, %v798
    %v808 = vmul.f32 %v807, %v803
    %v809 = vadd.f32 %v90, %v808
    %s810 = sadd.s32 0, 56
    %s811 = scalar_lea.vmem %s4, %s810
    %812 = vst [vmem:[%s811] sm:$0xff] %v806
    %s813 = sadd.s32 0, 64
    %s814 = scalar_lea.vmem %s4, %s813
    %815 = vst [vmem:[%s814] sm:$0xff] %v809
    %v816 = vmul.f32 %v192, %v759
    %v817 = vmul.f32 %v200, %v761
    %v818 = vadd.f32 %v816, %v817
    %v819 = vmul.f32 %v208, %v763
    %v820 = vadd.f32 %v818, %v819
    %v821 = vadd.f32 %v820, %v330
    %v822 = vmul.f32 %v194, %v759
    %v823 = vmul.f32 %v202, %v761
    %v824 = vadd.f32 %v822, %v823
    %v825 = vmul.f32 %v210, %v763
    %v826 = vadd.f32 %v824, %v825
    %v827 = vadd.f32 %v826, %v337
    %v828 = vmul.f32 %v197, %v759
    %v829 = vmul.f32 %v205, %v761
    %v830 = vadd.f32 %v828, %v829
    %v831 = vmul.f32 %v213, %v763
    %v832 = vadd.f32 %v830, %v831
    %v833 = vadd.f32 %v832, %v344
    %v834 = vand.u32 2147483647, %v833
    %vm835 = vcmp.lt.f32.partialorder %v834, 1e-09
    %vm836 = vcmp.lt.f32.partialorder %v833, 0.0
    %v837 = vsel %vm836, -1e-09, 1e-09
    %v838 = vsel %vm835, %v837, %v833
    %v839 = vrcp.pop %v838
    %v840 = vmul.f32 %v838, %v839
    %v841 = vsub.f32 2.0, %v840
    %v842 = vmul.f32 %v839, %v841
    %v843 = vmul.f32 %v821, %v842
    %v844 = vmul.f32 %v827, %v842
    %v845 = vmul.f32 %v843, %v843
    %v846 = vmul.f32 %v844, %v844
    %v847 = vadd.f32 %v845, %v846
    %v848 = vmul.f32 %v116, %v847
    %v849 = vadd.f32 %v848, 1.0
    %v850 = vmul.f32 %v362, %v843
    %v851 = vmul.f32 %v850, %v849
    %v852 = vadd.f32 %v106, %v851
    %v853 = vmul.f32 %v362, %v844
    %v854 = vmul.f32 %v853, %v849
    %v855 = vadd.f32 %v110, %v854
    %s856 = sadd.s32 0, 72
    %s857 = scalar_lea.vmem %s4, %s856
    %858 = vst [vmem:[%s857] sm:$0xff] %v852
    %s859 = sadd.s32 0, 80
    %s860 = scalar_lea.vmem %s4, %s859
    %861 = vst [vmem:[%s860] sm:$0xff] %v855
    %v862 = vsub.f32 %v499, %v258
    %v863 = vsub.f32 %v501, %v261
    %v864 = vsub.f32 %v503, %v264
    %v865 = vmul.f32 %v534, %v199
    %v866 = vmul.f32 %v537, %v207
    %v867 = vadd.f32 %v865, %v866
    %v868 = vmul.f32 %v540, %v215
    %v869 = vadd.f32 %v867, %v868
    %v870 = vmul.f32 %v534, %v862
    %v871 = vmul.f32 %v537, %v863
    %v872 = vadd.f32 %v870, %v871
    %v873 = vmul.f32 %v540, %v864
    %v874 = vadd.f32 %v872, %v873
    %v875 = vmul.f32 %v199, %v862
    %v876 = vmul.f32 %v207, %v863
    %v877 = vadd.f32 %v875, %v876
    %v878 = vmul.f32 %v215, %v864
    %v879 = vadd.f32 %v877, %v878
    %v880 = vmul.f32 %v869, %v869
    %v881 = vsub.f32 1.0, %v880
    %vm882 = vcmp.lt.f32.partialorder %v881, 1e-09
    %v883 = vsel %vm882, 1e-09, %v881
    %v884 = vrcp.pop %v883
    %v885 = vmul.f32 %v883, %v884
    %v886 = vsub.f32 2.0, %v885
    %v887 = vmul.f32 %v884, %v886
    %v888 = vmul.f32 %v869, %v879
    %v889 = vsub.f32 %v888, %v874
    %v890 = vmul.f32 %v889, %v887
    %v891 = vmul.f32 %v869, %v874
    %v892 = vsub.f32 %v879, %v891
    %v893 = vmul.f32 %v892, %v887
    %v894 = vmul.f32 %v890, %v534
    %v895 = vadd.f32 %v499, %v894
    %v896 = vmul.f32 %v890, %v537
    %v897 = vadd.f32 %v501, %v896
    %v898 = vmul.f32 %v890, %v540
    %v899 = vadd.f32 %v503, %v898
    %v900 = vmul.f32 %v893, %v199
    %v901 = vadd.f32 %v258, %v900
    %v902 = vmul.f32 %v893, %v207
    %v903 = vadd.f32 %v261, %v902
    %v904 = vmul.f32 %v893, %v215
    %v905 = vadd.f32 %v264, %v904
    %v906 = vadd.f32 %v895, %v901
    %v907 = vmul.f32 %v906, 0.5
    %v908 = vadd.f32 %v897, %v903
    %v909 = vmul.f32 %v908, 0.5
    %v910 = vadd.f32 %v899, %v905
    %v911 = vmul.f32 %v910, 0.5
    %v912 = vsub.f32 %v895, %v901
    %v913 = vsub.f32 %v897, %v903
    %v914 = vsub.f32 %v899, %v905
    %v915 = vmul.f32 %v912, %v912
    %v916 = vmul.f32 %v913, %v913
    %v917 = vadd.f32 %v915, %v916
    %v918 = vmul.f32 %v914, %v914
    %v919 = vadd.f32 %v917, %v918
    %v920 = vadd.f32 %v919, 1e-08
    %v921 = vrsqrt.pop %v920
    %v922 = vmul.f32 %v921, %v920
    %v923 = vmul.f32 %v922, %v921
    %v924 = vmul.f32 0.5, %v923
    %v925 = vsub.f32 1.5, %v924
    %v926 = vmul.f32 %v921, %v925
    %v927 = vmul.f32 %v920, %v926
    %vm928 = vcmp.eq.f32.partialorder %v920, inf
    %v929 = vsel %vm928, %v920, %v927
    %vm930 = vcmp.eq.f32.partialorder %v920, 0.0
    %v931 = vand.u32 %v920, 2147483648
    %v932 = vsel %vm930, %v931, %v929
    %s933 = sadd.s32 0, 144
    %s934 = scalar_lea.vmem %s4, %s933
    %935 = vst [vmem:[%s934] sm:$0xff] %v932
    %v936 = vmul.f32 %v932, 2.0
    %v937 = vadd.f32 %v936, %v292
    %v938 = vadd.f32 %v937, %v784
    %v939 = vmul.f32 %v938, 0.25
    %s940 = sadd.s32 0, 120
    %s941 = scalar_lea.vmem %s4, %s940
    %942 = vst [vmem:[%s941] sm:$0xff] %v939
    %v943 = vmul.f32 %v907, 2.0
    %v944 = vadd.f32 %v267, %v943
    %v945 = vadd.f32 %v944, %v759
    %v946 = vmul.f32 %v945, 0.25
    %v947 = vmul.f32 %v909, 2.0
    %v948 = vadd.f32 %v269, %v947
    %v949 = vadd.f32 %v948, %v761
    %v950 = vmul.f32 %v949, 0.25
    %v951 = vmul.f32 %v911, 2.0
    %v952 = vadd.f32 %v271, %v951
    %v953 = vadd.f32 %v952, %v763
    %v954 = vmul.f32 %v953, 0.25
    %955 = vst [vmem:[%s4] sm:$0xff] %v946
    %s956 = scalar_lea.vmem %s4, %s70
    %957 = vst [vmem:[%s956] sm:$0xff] %v950
    %s958 = scalar_lea.vmem %s4, %s73
    %959 = vst [vmem:[%s958] sm:$0xff] %v954
    %v960 = vand.u32 2147483647, %v954
    %vm961 = vcmp.lt.f32.partialorder %v960, 1e-09
    %vm962 = vcmp.lt.f32.partialorder %v954, 0.0
    %v963 = vsel %vm962, -1e-09, 1e-09
    %v964 = vsel %vm961, %v963, %v954
    %v965 = vrcp.pop %v964
    %v966 = vmul.f32 %v964, %v965
    %v967 = vsub.f32 2.0, %v966
    %v968 = vmul.f32 %v965, %v967
    %v969 = vmul.f32 %v946, %v968
    %v970 = vmul.f32 %v950, %v968
    %v971 = vmul.f32 %v969, %v969
    %v972 = vmul.f32 %v970, %v970
    %v973 = vadd.f32 %v971, %v972
    %v974 = vmul.f32 %v96, %v973
    %v975 = vadd.f32 %v974, 1.0
    %v976 = vmul.f32 %v312, %v969
    %v977 = vmul.f32 %v976, %v975
    %v978 = vadd.f32 %v86, %v977
    %v979 = vmul.f32 %v312, %v970
    %v980 = vmul.f32 %v979, %v975
    %v981 = vadd.f32 %v90, %v980
    %s982 = scalar_lea.vmem %s4, %s76
    %983 = vst [vmem:[%s982] sm:$0xff] %v978
    %s984 = sadd.s32 0, 32
    %s985 = scalar_lea.vmem %s4, %s984
    %986 = vst [vmem:[%s985] sm:$0xff] %v981
    %v987 = vmul.f32 %v192, %v946
    %v988 = vmul.f32 %v200, %v950
    %v989 = vadd.f32 %v987, %v988
    %v990 = vmul.f32 %v208, %v954
    %v991 = vadd.f32 %v989, %v990
    %v992 = vadd.f32 %v991, %v330
    %v993 = vmul.f32 %v194, %v946
    %v994 = vmul.f32 %v202, %v950
    %v995 = vadd.f32 %v993, %v994
    %v996 = vmul.f32 %v210, %v954
    %v997 = vadd.f32 %v995, %v996
    %v998 = vadd.f32 %v997, %v337
    %v999 = vmul.f32 %v197, %v946
    %v1000 = vmul.f32 %v205, %v950
    %v1001 = vadd.f32 %v999, %v1000
    %v1002 = vmul.f32 %v213, %v954
    %v1003 = vadd.f32 %v1001, %v1002
    %v1004 = vadd.f32 %v1003, %v344
    %v1005 = vand.u32 2147483647, %v1004
    %vm1006 = vcmp.lt.f32.partialorder %v1005, 1e-09
    %vm1007 = vcmp.lt.f32.partialorder %v1004, 0.0
    %v1008 = vsel %vm1007, -1e-09, 1e-09
    %v1009 = vsel %vm1006, %v1008, %v1004
    %v1010 = vrcp.pop %v1009
    %v1011 = vmul.f32 %v1009, %v1010
    %v1012 = vsub.f32 2.0, %v1011
    %v1013 = vmul.f32 %v1010, %v1012
    %v1014 = vmul.f32 %v992, %v1013
    %v1015 = vmul.f32 %v998, %v1013
    %v1016 = vmul.f32 %v362, %v1014
    %v1017 = vadd.f32 %v106, %v1016
    %v1018 = vmul.f32 %v362, %v1015
    %v1019 = vadd.f32 %v110, %v1018
    %v1020 = vsub.f32 %v1017, %v86
    %v1021 = vmul.f32 %v1020, %v88
    %v1022 = vsub.f32 %v1019, %v90
    %v1023 = vmul.f32 %v1022, %v88
    %v1024 = vmul.f32 %v1021, %v1021
    %v1025 = vmul.f32 %v1023, %v1023
    %v1026 = vadd.f32 %v1024, %v1025
    %v1027 = vmul.f32 %v96, %v1026
    %v1028 = vadd.f32 %v1027, 1.0
    %v1029 = vmul.f32 %v312, %v1021
    %v1030 = vmul.f32 %v1029, %v1028
    %v1031 = vadd.f32 %v86, %v1030
    %v1032 = vmul.f32 %v312, %v1023
    %v1033 = vmul.f32 %v1032, %v1028
    %v1034 = vadd.f32 %v90, %v1033
    %s1035 = sadd.s32 0, 40
    %s1036 = scalar_lea.vmem %s4, %s1035
    %1037 = vst [vmem:[%s1036] sm:$0xff] %v1031
    %s1038 = sadd.s32 0, 48
    %s1039 = scalar_lea.vmem %s4, %s1038
    %1040 = vst [vmem:[%s1039] sm:$0xff] %v1034
    %v1041 = vlaneseq
    %v1042 = vshrl.u32 %v1041, 7
    %v1043 = vlaneseq
    %v1044 = vand.u32 %v1043, 127
    %s1045 = smul.u32 0, 128
    %s1046 = sadd.s32 %s68, %s1045
    %v1047 = vmul.u32 %v1042, 128
    %v1048 = vstv %s1046
    %v1049 = vadd.s32 %v1048, %v1047
    %v1050 = vadd.s32 %v1049, %v1044
    %v1051 = vstv %s67
    %vm1052 = vcmp.lt.s32.totalorder %v1050, %v1051
    %v1053 = vsel %vm1052, %v545, 0.0
    %v1054 = vrot.slane %v1053, 4
    %v1055 = vadd.f32 %v1053, %v1054
    %v1056 = vrot.slane %v1055, 2
    %v1057 = vadd.f32 %v1055, %v1056
    %v1058 = vrot.slane %v1057, 1
    %v1059 = vadd.f32 %v1057, %v1058
    %v1060 = vadd.f32 %v1059, 0.0
    %v1061 = vsel %vm1052, %v713, 0.0
    %v1062 = vrot.slane %v1061, 4
    %v1063 = vadd.f32 %v1061, %v1062
    %v1064 = vrot.slane %v1063, 2
    %v1065 = vadd.f32 %v1063, %v1064
    %v1066 = vrot.slane %v1065, 1
    %v1067 = vadd.f32 %v1065, %v1066
    %v1068 = vadd.f32 %v1067, 0.0
    %v1069 = vsel %vm1052, %v158, 0.0
    %v1070 = vrot.slane %v1069, 4
    %v1071 = vadd.f32 %v1069, %v1070
    %v1072 = vrot.slane %v1071, 2
    %v1073 = vadd.f32 %v1071, %v1072
    %v1074 = vrot.slane %v1073, 1
    %v1075 = vadd.f32 %v1073, %v1074
    %v1076 = vadd.f32 %v1075, 0.0
    %v1077 = vsel %vm1052, %v159, 0.0
    %v1078 = vrot.slane %v1077, 4
    %v1079 = vadd.f32 %v1077, %v1078
    %v1080 = vrot.slane %v1079, 2
    %v1081 = vadd.f32 %v1079, %v1080
    %v1082 = vrot.slane %v1081, 1
    %v1083 = vadd.f32 %v1081, %v1082
    %v1084 = vadd.f32 %v1083, 0.0
    %1085 = vst [vmem:[%s5] sm:$0x1] %v1060
    %s1086 = scalar_lea.vmem %s5, 1
    %1087 = vst [vmem:[%s1086] sm:$0x1] %v1068
    %s1088 = scalar_lea.vmem %s5, 2
    %1089 = vst [vmem:[%s1088] sm:$0x1] %v1076
    %s1090 = scalar_lea.vmem %s5, 3
    %1091 = vst [vmem:[%s1090] sm:$0x1] %v1084
    // Predicated region
    $region22: #{arena_reprojection_forward.1} parent=1 // pred_check
      _
    $region23: #{arena_reprojection_forward.1} parent=1 // pred_check_branch
      %1093 = sbr.rel (0) target = $region25
    $region24: #{arena_reprojection_forward.1} parent=1 // pred_region
      _
    $region25: #{arena_reprojection_forward.1} parent=1 // pred_fallthru
      _
    // Predicated region
    $region26: #{arena_reprojection_forward.1} parent=1 // pred_check
      _
    $region27: #{arena_reprojection_forward.1} parent=1 // pred_check_branch
      %1095 = sbr.rel (0) target = $region29
    $region28: #{arena_reprojection_forward.1} parent=1 // pred_region
      _
    $region29: #{arena_reprojection_forward.1} parent=1 // pred_fallthru
      _
    // Predicated region
    $region30: #{arena_reprojection_forward.1} parent=1 // pred_check
      _
    $region31: #{arena_reprojection_forward.1} parent=1 // pred_check_branch
      %1097 = sbr.rel (0) target = $region33
    $region32: #{arena_reprojection_forward.1} parent=1 // pred_region
      _
    $region33: #{arena_reprojection_forward.1} parent=1 // pred_fallthru
      _
    // Predicated region
    $region34: #{arena_reprojection_forward.1} parent=1 // pred_check
      _
    $region35: #{arena_reprojection_forward.1} parent=1 // pred_check_branch
      %1099 = sbr.rel (0) target = $region37
    $region36: #{arena_reprojection_forward.1} parent=1 // pred_region
      _
    $region37: #{arena_reprojection_forward.1} parent=1 // pred_fallthru
      _
    %1100 = vsyncpa [#allocation4], 1

</llo_original>
